<compile_context>
chip_gen: v6e
topology: v6e:2x2x1
jax: 0.10.0
libtpu: 0.0.40
codegen_flags: <defaults>
</compile_context>

<pallas_src>
import numpy as np
import jax
import jax.numpy as jnp
from jax import lax
from jax.experimental import pallas as pl
from jax.experimental.pallas import tpu as pltpu

_EPS = 1e-5
CP = 128  # lane-dense channel padding (TPU lane width)


def residual_block_kernel(x_ref, w1wd_ref, b1wd_ref, w2_ref, b2_ref,
                          w3_ref, b3_ref, o_ref, pad_ref):
    hp, wp, c1p = pad_ref.shape          # padded-scratch shape -> H+2, W+2, 128
    h, w = hp - 2, wp - 2
    hw = h * w

    # --- zero only the 4 halo strips of the bf16 padded scratch ---
    # (done unconditionally each step: cheap, and correct under megacore
    #  sharding where each core owns a private scratch; interior is fully
    #  overwritten below before it is read)
    zrow = jnp.zeros((1, wp, c1p), pad_ref.dtype)
    zcol = jnp.zeros((h, 1, c1p), pad_ref.dtype)
    pad_ref[0:1, :, :] = zrow
    pad_ref[hp - 1:hp, :, :] = zrow
    pad_ref[1:h + 1, 0:1, :] = zcol
    pad_ref[1:h + 1, wp - 1:wp, :] = zcol

    x = x_ref[...]                       # (H*W, 128) bf16, one image

    # --- fused [ConvBlock1 1x1 | identity-downsample 1x1], BN scale pre-folded ---
    y = jnp.dot(x, w1wd_ref[...], preferred_element_type=jnp.float32) + b1wd_ref[...]
    y1 = jnp.maximum(y[:, :c1p], 0.0)    # ConvBlock1 branch: + ReLU        (f32)
    idn = y[:, c1p:]                     # identity branch: no activation   (f32)

    # --- ConvBlock2: 3x3 conv (stride 1, pad 1) via bf16 padded scratch +
    #     9 accumulating matmuls (no im2col concatenate / no K=1152 staging) ---
    pad_ref[1:h + 1, 1:w + 1, :] = y1.reshape(h, w, c1p).astype(pad_ref.dtype)
    acc = jnp.zeros((hw, c1p), jnp.float32)
    for k in range(9):                   # static unroll: 9 (128,128) MXU matmuls
        dy, dx = k // 3, k % 3
        tap = pad_ref[dy:dy + h, dx:dx + w, :].reshape(hw, c1p)      # bf16
        acc = acc + jnp.dot(tap, w2_ref[k * c1p:(k + 1) * c1p, :],
                            preferred_element_type=jnp.float32)
    y2 = jnp.maximum(acc + b2_ref[...], 0.0)                         # BN + ReLU (f32)

    # --- ConvBlock3: 1x1 conv, BN, no activation ---
    y3 = jnp.dot(y2.astype(jnp.bfloat16), w3_ref[...],
                 preferred_element_type=jnp.float32) + b3_ref[...]

    # DropPath(p=0) and layer_scale=None are identities; residual add + ReLU
    # in f32, store bf16 (lane-dense 128-wide output).
    o_ref[...] = jnp.maximum(idn + y3, 0.0).astype(o_ref.dtype)


def make_params(key, cin, c1, c3, c4, cp=CP):
    """Deterministic init matching the PyTorch module: conv weight ~ N(0, 2/(k^2*Cout)),
    conv bias = 0.  BatchNorm (inference, fresh stats: gamma=1, beta=0, mean=0, var=1)
    is folded: scale goes into the conv weights, bias stays as a per-channel add."""
    k1, k2, k3, kd = jax.random.split(key, 4)
    # torch layout (Cout, Cin, kh, kw)
    tw = {
        'w1': jax.random.normal(k1, (c1, cin, 1, 1), jnp.float32) * np.sqrt(2.0 / (1 * 1 * c1)),
        'w2': jax.random.normal(k2, (c3, c1, 3, 3), jnp.float32) * np.sqrt(2.0 / (3 * 3 * c3)),
        'w3': jax.random.normal(k3, (c4, c3, 1, 1), jnp.float32) * np.sqrt(2.0 / (1 * 1 * c4)),
        'wd': jax.random.normal(kd, (c4, cin, 1, 1), jnp.float32) * np.sqrt(2.0 / (1 * 1 * c4)),
    }

    def bn_fold(cout, gamma=1.0, beta=0.0, mean=0.0, var=1.0, conv_bias=0.0):
        s = np.float32(gamma / np.sqrt(var + _EPS))
        b = np.full((cout,), beta + (conv_bias - mean) * s, np.float32)
        return s, b

    def padw(w, rows, cols):
        return jnp.pad(w, ((0, rows - w.shape[0]), (0, cols - w.shape[1])))

    s1, b1 = bn_fold(c1)
    s2, b2 = bn_fold(c3)
    s3, b3 = bn_fold(c4)
    sd, bd = bn_fold(c4)

    # fused [w1 | wd], BN scales folded, channels padded to 128 lanes
    w1 = jnp.transpose(tw['w1'][:, :, 0, 0], (1, 0)) * s1        # (cin, c1)
    wd = jnp.transpose(tw['wd'][:, :, 0, 0], (1, 0)) * sd        # (cin, c4)
    w1wd = jnp.concatenate([padw(w1, cp, cp), padw(wd, cp, cp)], axis=1)   # (cp, 2cp)
    b1wd = jnp.concatenate([jnp.pad(b1, (0, cp - c1)),
                            jnp.pad(bd, (0, cp - c4))])[None, :]           # (1, 2cp)

    # 3x3 taps (k = 3*dy+dx holds W[:, :, dy, dx]^T), stacked so the kernel can
    # take per-tap (128,128) slices for the accumulating matmuls.
    w2_taps = jnp.transpose(tw['w2'], (2, 3, 1, 0)).reshape(9, c1, c3) * s2
    w2 = jnp.concatenate([padw(w2_taps[k], cp, cp) for k in range(9)], axis=0)  # (9cp, cp)
    b2p = jnp.pad(b2, (0, cp - c3))[None, :]

    w3 = padw(jnp.transpose(tw['w3'][:, :, 0, 0], (1, 0)) * s3, cp, cp)         # (cp, cp)
    b3p = jnp.pad(b3, (0, cp - c4))[None, :]

    params = {
        'w1wd': w1wd.astype(jnp.bfloat16), 'b1wd': b1wd,
        'w2':   w2.astype(jnp.bfloat16),   'b2':   b2p,
        'w3':   w3.astype(jnp.bfloat16),   'b3':   b3p,
    }
    return params, tw


def residual_block(x_flat, params, n, h, w):
    """x_flat: (N*H*W, 128) bf16, channels already zero-padded, N-major rows.
    Returns (N*H*W, 128) bf16 (padded output channels beyond C4 are zeros)."""
    nhw, cp = x_flat.shape
    hw = h * w
    c4p = params['w3'].shape[1]

    return pl.pallas_call(
        residual_block_kernel,
        out_shape=jax.ShapeDtypeStruct((nhw, c4p), jnp.bfloat16),
        grid=(n,),                                   # one image per grid step
        in_specs=[
            pl.BlockSpec((hw, cp), lambda i: (i, 0)),            # x advances
            pl.BlockSpec(params['w1wd'].shape, lambda i: (0, 0)),  # weights resident
            pl.BlockSpec(params['b1wd'].shape, lambda i: (0, 0)),
            pl.BlockSpec(params['w2'].shape, lambda i: (0, 0)),
            pl.BlockSpec(params['b2'].shape, lambda i: (0, 0)),
            pl.BlockSpec(params['w3'].shape, lambda i: (0, 0)),
            pl.BlockSpec(params['b3'].shape, lambda i: (0, 0)),
        ],
        out_specs=pl.BlockSpec((hw, c4p), lambda i: (i, 0)),
        scratch_shapes=[pltpu.VMEM((h + 2, w + 2, cp), jnp.bfloat16)],
        compiler_params=pltpu.CompilerParams(
            dimension_semantics=("parallel",),       # v7x: 2 TCs both get images
            vmem_limit_bytes=32 * 1024 * 1024),
    )(x_flat, params['w1wd'], params['b1wd'], params['w2'],
      params['b2'], params['w3'], params['b3'])


def reference_nhwc(x_nhwc, tw):
    """Independent pure-JAX reference (lax.conv) at the kernel's precision policy:
    BN scale folded into f32 weights, bf16 operands, f32 accumulation."""
    s = np.float32(1.0 / np.sqrt(1.0 + _EPS))   # fresh-init BN: gamma=1, mean=0, var=1

    def conv(inp, w_torch, pad=0):
        w = (jnp.transpose(w_torch, (2, 3, 1, 0)) * s).astype(jnp.bfloat16)   # HWIO
        return lax.conv_general_dilated(
            inp.astype(jnp.bfloat16), w, window_strides=(1, 1),
            padding=((pad, pad), (pad, pad)),
            dimension_numbers=('NHWC', 'HWIO', 'NHWC'),
            preferred_element_type=jnp.float32,
            precision=lax.Precision.HIGHEST)

    y = jax.nn.relu(conv(x_nhwc, tw['w1']))
    y = jax.nn.relu(conv(y, tw['w2'], pad=1))
    y = conv(y, tw['w3'])
    idn = conv(x_nhwc, tw['wd'])
    return jax.nn.relu(idn + y)


if __name__ == "__main__":
    # Small shapes consistent with a bottleneck ResidualBlock (bold=True).
    N, H, W = 2, 8, 8
    Cin, C1, C3, C4 = 16, 8, 8, 32

    key = jax.random.PRNGKey(0)
    kx, kp = jax.random.split(key)

    x_nchw = jax.random.normal(kx, (N, Cin, H, W), jnp.float32)   # PyTorch NCHW input
    x_nhwc = jnp.transpose(x_nchw, (0, 2, 3, 1))                  # kernel layout
    x_flat = jnp.pad(x_nhwc, ((0, 0), (0, 0), (0, 0), (0, CP - Cin)))
    x_flat = x_flat.reshape(N * H * W, CP).astype(jnp.bfloat16)   # lane-dense bf16

    params, torch_weights = make_params(kp, Cin, C1, C3, C4, cp=CP)

    out_flat = residual_block(x_flat, params, N, H, W)
    out_flat = jax.block_until_ready(out_flat)
    out = out_flat.astype(jnp.float32).reshape(N, H, W, -1)[..., :C4]  # drop lane padding

    ref = reference_nhwc(x_nhwc, torch_weights)
    err = float(jnp.max(jnp.abs(out - ref)))
    # bf16 operands with f32 accumulation AND a bf16 output store: the kernel and the
    # f32 lax.conv reference can differ by ~1 bf16 ULP on intermediates plus up to
    # 0.5 bf16 ULP from the final output cast (outputs reach ~5, ULP ~= 0.03), so a
    # 6e-2 bound covers the worst case comfortably.
    assert err < 6e-2, f"max abs error vs reference: {err}"

    print("KERNEL_OK")
</pallas_src>

<mosaic_0001>
module attributes {stable_mosaic.version = 11 : i64} {
  func.func @residual_block_kernel(%arg0: i32, %arg1: memref<64x128xbf16, #tpu.memory_space<vmem>>, %arg2: memref<128x256xbf16, #tpu.memory_space<vmem>>, %arg3: memref<1x256xf32, #tpu.memory_space<vmem>>, %arg4: memref<1152x128xbf16, #tpu.memory_space<vmem>>, %arg5: memref<1x128xf32, #tpu.memory_space<vmem>>, %arg6: memref<128x128xbf16, #tpu.memory_space<vmem>>, %arg7: memref<1x128xf32, #tpu.memory_space<vmem>>, %arg8: memref<64x128xbf16, #tpu.memory_space<vmem>>, %arg9: memref<10x10x128xbf16, #tpu.memory_space<vmem>>) attributes {dimension_semantics = [#tpu.dimension_semantics<parallel>], iteration_bounds = array<i64: 2>, scalar_prefetch = 0 : i64, scratch_operands = 1 : i64, tpu.core_type = #tpu.core_type<tc>, window_params = [{transform_indices = @transform_0, window_bounds = array<i64: 64, 128>}, {pipeline_mode = #tpu.pipeline_mode<synchronous>, transform_indices = @transform_1, window_bounds = array<i64: 128, 256>}, {pipeline_mode = #tpu.pipeline_mode<synchronous>, transform_indices = @transform_2, window_bounds = array<i64: 1, 256>}, {pipeline_mode = #tpu.pipeline_mode<synchronous>, transform_indices = @transform_3, window_bounds = array<i64: 1152, 128>}, {pipeline_mode = #tpu.pipeline_mode<synchronous>, transform_indices = @transform_4, window_bounds = array<i64: 1, 128>}, {pipeline_mode = #tpu.pipeline_mode<synchronous>, transform_indices = @transform_5, window_bounds = array<i64: 128, 128>}, {pipeline_mode = #tpu.pipeline_mode<synchronous>, transform_indices = @transform_6, window_bounds = array<i64: 1, 128>}, {transform_indices = @transform_7, window_bounds = array<i64: 64, 128>}]} {
    %cst = arith.constant 0.000000e+00 : bf16
    %0 = vector.broadcast %cst : bf16 to vector<1x10x128xbf16>
    %cst_0 = arith.constant 0.000000e+00 : bf16
    %1 = vector.broadcast %cst_0 : bf16 to vector<8x1x128xbf16>
    %c0 = arith.constant 0 : index
    %c0_1 = arith.constant 0 : index
    %c0_2 = arith.constant 0 : index
    %2 = vector.load %arg9[%c0, %c0_1, %c0_2] : memref<10x10x128xbf16, #tpu.memory_space<vmem>>, vector<1x10x128xbf16>
    tpu.vector_store %arg9[%c0, %c0_1, %c0_2], %0 {strides = array<i32>} : memref<10x10x128xbf16, #tpu.memory_space<vmem>>, vector<1x10x128xbf16>,
    %c9 = arith.constant 9 : index
    %c0_3 = arith.constant 0 : index
    %c0_4 = arith.constant 0 : index
    %3 = vector.load %arg9[%c9, %c0_3, %c0_4] : memref<10x10x128xbf16, #tpu.memory_space<vmem>>, vector<1x10x128xbf16>
    tpu.vector_store %arg9[%c9, %c0_3, %c0_4], %0 {strides = array<i32>} : memref<10x10x128xbf16, #tpu.memory_space<vmem>>, vector<1x10x128xbf16>,
    %c1 = arith.constant 1 : index
    %c0_5 = arith.constant 0 : index
    %c0_6 = arith.constant 0 : index
    %4 = vector.load %arg9[%c1, %c0_5, %c0_6] : memref<10x10x128xbf16, #tpu.memory_space<vmem>>, vector<8x1x128xbf16>
    tpu.vector_store %arg9[%c1, %c0_5, %c0_6], %1 {strides = array<i32>} : memref<10x10x128xbf16, #tpu.memory_space<vmem>>, vector<8x1x128xbf16>,
    %c1_7 = arith.constant 1 : index
    %c9_8 = arith.constant 9 : index
    %c0_9 = arith.constant 0 : index
    %5 = vector.load %arg9[%c1_7, %c9_8, %c0_9] : memref<10x10x128xbf16, #tpu.memory_space<vmem>>, vector<8x1x128xbf16>
    tpu.vector_store %arg9[%c1_7, %c9_8, %c0_9], %1 {strides = array<i32>} : memref<10x10x128xbf16, #tpu.memory_space<vmem>>, vector<8x1x128xbf16>,
    %c0_10 = arith.constant 0 : index
    %c0_11 = arith.constant 0 : index
    %6 = vector.load %arg1[%c0_10, %c0_11] : memref<64x128xbf16, #tpu.memory_space<vmem>>, vector<64x128xbf16>
    %c0_12 = arith.constant 0 : index
    %c0_13 = arith.constant 0 : index
    %7 = vector.load %arg2[%c0_12, %c0_13] : memref<128x256xbf16, #tpu.memory_space<vmem>>, vector<128x256xbf16>
    %cst_14 = arith.constant dense<0.000000e+00> : vector<64x256xf32>
    %8 = tpu.matmul %6, %7, %cst_14 {dimension_numbers = #tpu.dot_dimension_numbers<[1], [0], [0], [1], [0, 0, 1, 1], [], []>} : vector<64x128xbf16>, vector<128x256xbf16>, vector<64x256xf32> -> vector<64x256xf32>
    %c0_15 = arith.constant 0 : index
    %c0_16 = arith.constant 0 : index
    %9 = vector.load %arg3[%c0_15, %c0_16] : memref<1x256xf32, #tpu.memory_space<vmem>>, vector<1x256xf32>
    %10 = vector.broadcast %9 : vector<1x256xf32> to vector<64x256xf32>
    %11 = arith.addf %8, %10 : vector<64x256xf32>
    %12 = vector.extract_strided_slice %11 {offsets = [0, 0], sizes = [64, 128], strides = [1, 1]} : vector<64x256xf32> to vector<64x128xf32>
    %cst_17 = arith.constant 0.000000e+00 : f32
    %13 = vector.broadcast %cst_17 : f32 to vector<64x128xf32>
    %14 = arith.maximumf %12, %13 : vector<64x128xf32>
    %15 = vector.extract_strided_slice %11 {offsets = [0, 128], sizes = [64, 128], strides = [1, 1]} : vector<64x256xf32> to vector<64x128xf32>
    %16 = vector.shape_cast %14 : vector<64x128xf32> to vector<8x8x128xf32>
    %17 = arith.truncf %16 : vector<8x8x128xf32> to vector<8x8x128xbf16>
    %c1_18 = arith.constant 1 : index
    %c1_19 = arith.constant 1 : index
    %c0_20 = arith.constant 0 : index
    %18 = vector.load %arg9[%c1_18, %c1_19, %c0_20] : memref<10x10x128xbf16, #tpu.memory_space<vmem>>, vector<8x8x128xbf16>
    tpu.vector_store %arg9[%c1_18, %c1_19, %c0_20], %17 {strides = array<i32>} : memref<10x10x128xbf16, #tpu.memory_space<vmem>>, vector<8x8x128xbf16>,
    %cst_21 = arith.constant 0.000000e+00 : f32
    %19 = vector.broadcast %cst_21 : f32 to vector<64x128xf32>
    %c0_22 = arith.constant 0 : index
    %c0_23 = arith.constant 0 : index
    %c0_24 = arith.constant 0 : index
    %20 = vector.load %arg9[%c0_22, %c0_23, %c0_24] : memref<10x10x128xbf16, #tpu.memory_space<vmem>>, vector<8x8x128xbf16>
    %21 = vector.shape_cast %20 : vector<8x8x128xbf16> to vector<64x128xbf16>
    %c0_25 = arith.constant 0 : index
    %c0_26 = arith.constant 0 : index
    %22 = vector.load %arg4[%c0_25, %c0_26] : memref<1152x128xbf16, #tpu.memory_space<vmem>>, vector<128x128xbf16>
    %cst_27 = arith.constant dense<0.000000e+00> : vector<64x128xf32>
    %23 = tpu.matmul %21, %22, %cst_27 {dimension_numbers = #tpu.dot_dimension_numbers<[1], [0], [0], [1], [0, 0, 1, 1], [], []>} : vector<64x128xbf16>, vector<128x128xbf16>, vector<64x128xf32> -> vector<64x128xf32>
    %24 = arith.addf %19, %23 : vector<64x128xf32>
    %c0_28 = arith.constant 0 : index
    %c1_29 = arith.constant 1 : index
    %c0_30 = arith.constant 0 : index
    %25 = vector.load %arg9[%c0_28, %c1_29, %c0_30] : memref<10x10x128xbf16, #tpu.memory_space<vmem>>, vector<8x8x128xbf16>
    %26 = vector.shape_cast %25 : vector<8x8x128xbf16> to vector<64x128xbf16>
    %c128 = arith.constant 128 : index
    %c0_31 = arith.constant 0 : index
    %27 = vector.load %arg4[%c128, %c0_31] : memref<1152x128xbf16, #tpu.memory_space<vmem>>, vector<128x128xbf16>
    %cst_32 = arith.constant dense<0.000000e+00> : vector<64x128xf32>
    %28 = tpu.matmul %26, %27, %cst_32 {dimension_numbers = #tpu.dot_dimension_numbers<[1], [0], [0], [1], [0, 0, 1, 1], [], []>} : vector<64x128xbf16>, vector<128x128xbf16>, vector<64x128xf32> -> vector<64x128xf32>
    %29 = arith.addf %24, %28 : vector<64x128xf32>
    %c0_33 = arith.constant 0 : index
    %c2 = arith.constant 2 : index
    %c0_34 = arith.constant 0 : index
    %30 = vector.load %arg9[%c0_33, %c2, %c0_34] : memref<10x10x128xbf16, #tpu.memory_space<vmem>>, vector<8x8x128xbf16>
    %31 = vector.shape_cast %30 : vector<8x8x128xbf16> to vector<64x128xbf16>
    %c256 = arith.constant 256 : index
    %c0_35 = arith.constant 0 : index
    %32 = vector.load %arg4[%c256, %c0_35] : memref<1152x128xbf16, #tpu.memory_space<vmem>>, vector<128x128xbf16>
    %cst_36 = arith.constant dense<0.000000e+00> : vector<64x128xf32>
    %33 = tpu.matmul %31, %32, %cst_36 {dimension_numbers = #tpu.dot_dimension_numbers<[1], [0], [0], [1], [0, 0, 1, 1], [], []>} : vector<64x128xbf16>, vector<128x128xbf16>, vector<64x128xf32> -> vector<64x128xf32>
    %34 = arith.addf %29, %33 : vector<64x128xf32>
    %c1_37 = arith.constant 1 : index
    %c0_38 = arith.constant 0 : index
    %c0_39 = arith.constant 0 : index
    %35 = vector.load %arg9[%c1_37, %c0_38, %c0_39] : memref<10x10x128xbf16, #tpu.memory_space<vmem>>, vector<8x8x128xbf16>
    %36 = vector.shape_cast %35 : vector<8x8x128xbf16> to vector<64x128xbf16>
    %c384 = arith.constant 384 : index
    %c0_40 = arith.constant 0 : index
    %37 = vector.load %arg4[%c384, %c0_40] : memref<1152x128xbf16, #tpu.memory_space<vmem>>, vector<128x128xbf16>
    %cst_41 = arith.constant dense<0.000000e+00> : vector<64x128xf32>
    %38 = tpu.matmul %36, %37, %cst_41 {dimension_numbers = #tpu.dot_dimension_numbers<[1], [0], [0], [1], [0, 0, 1, 1], [], []>} : vector<64x128xbf16>, vector<128x128xbf16>, vector<64x128xf32> -> vector<64x128xf32>
    %39 = arith.addf %34, %38 : vector<64x128xf32>
    %c1_42 = arith.constant 1 : index
    %c1_43 = arith.constant 1 : index
    %c0_44 = arith.constant 0 : index
    %40 = vector.load %arg9[%c1_42, %c1_43, %c0_44] : memref<10x10x128xbf16, #tpu.memory_space<vmem>>, vector<8x8x128xbf16>
    %41 = vector.shape_cast %40 : vector<8x8x128xbf16> to vector<64x128xbf16>
    %c512 = arith.constant 512 : index
    %c0_45 = arith.constant 0 : index
    %42 = vector.load %arg4[%c512, %c0_45] : memref<1152x128xbf16, #tpu.memory_space<vmem>>, vector<128x128xbf16>
    %cst_46 = arith.constant dense<0.000000e+00> : vector<64x128xf32>
    %43 = tpu.matmul %41, %42, %cst_46 {dimension_numbers = #tpu.dot_dimension_numbers<[1], [0], [0], [1], [0, 0, 1, 1], [], []>} : vector<64x128xbf16>, vector<128x128xbf16>, vector<64x128xf32> -> vector<64x128xf32>
    %44 = arith.addf %39, %43 : vector<64x128xf32>
    %c1_47 = arith.constant 1 : index
    %c2_48 = arith.constant 2 : index
    %c0_49 = arith.constant 0 : index
    %45 = vector.load %arg9[%c1_47, %c2_48, %c0_49] : memref<10x10x128xbf16, #tpu.memory_space<vmem>>, vector<8x8x128xbf16>
    %46 = vector.shape_cast %45 : vector<8x8x128xbf16> to vector<64x128xbf16>
    %c640 = arith.constant 640 : index
    %c0_50 = arith.constant 0 : index
    %47 = vector.load %arg4[%c640, %c0_50] : memref<1152x128xbf16, #tpu.memory_space<vmem>>, vector<128x128xbf16>
    %cst_51 = arith.constant dense<0.000000e+00> : vector<64x128xf32>
    %48 = tpu.matmul %46, %47, %cst_51 {dimension_numbers = #tpu.dot_dimension_numbers<[1], [0], [0], [1], [0, 0, 1, 1], [], []>} : vector<64x128xbf16>, vector<128x128xbf16>, vector<64x128xf32> -> vector<64x128xf32>
    %49 = arith.addf %44, %48 : vector<64x128xf32>
    %c2_52 = arith.constant 2 : index
    %c0_53 = arith.constant 0 : index
    %c0_54 = arith.constant 0 : index
    %50 = vector.load %arg9[%c2_52, %c0_53, %c0_54] : memref<10x10x128xbf16, #tpu.memory_space<vmem>>, vector<8x8x128xbf16>
    %51 = vector.shape_cast %50 : vector<8x8x128xbf16> to vector<64x128xbf16>
    %c768 = arith.constant 768 : index
    %c0_55 = arith.constant 0 : index
    %52 = vector.load %arg4[%c768, %c0_55] : memref<1152x128xbf16, #tpu.memory_space<vmem>>, vector<128x128xbf16>
    %cst_56 = arith.constant dense<0.000000e+00> : vector<64x128xf32>
    %53 = tpu.matmul %51, %52, %cst_56 {dimension_numbers = #tpu.dot_dimension_numbers<[1], [0], [0], [1], [0, 0, 1, 1], [], []>} : vector<64x128xbf16>, vector<128x128xbf16>, vector<64x128xf32> -> vector<64x128xf32>
    %54 = arith.addf %49, %53 : vector<64x128xf32>
    %c2_57 = arith.constant 2 : index
    %c1_58 = arith.constant 1 : index
    %c0_59 = arith.constant 0 : index
    %55 = vector.load %arg9[%c2_57, %c1_58, %c0_59] : memref<10x10x128xbf16, #tpu.memory_space<vmem>>, vector<8x8x128xbf16>
    %56 = vector.shape_cast %55 : vector<8x8x128xbf16> to vector<64x128xbf16>
    %c896 = arith.constant 896 : index
    %c0_60 = arith.constant 0 : index
    %57 = vector.load %arg4[%c896, %c0_60] : memref<1152x128xbf16, #tpu.memory_space<vmem>>, vector<128x128xbf16>
    %cst_61 = arith.constant dense<0.000000e+00> : vector<64x128xf32>
    %58 = tpu.matmul %56, %57, %cst_61 {dimension_numbers = #tpu.dot_dimension_numbers<[1], [0], [0], [1], [0, 0, 1, 1], [], []>} : vector<64x128xbf16>, vector<128x128xbf16>, vector<64x128xf32> -> vector<64x128xf32>
    %59 = arith.addf %54, %58 : vector<64x128xf32>
    %c2_62 = arith.constant 2 : index
    %c2_63 = arith.constant 2 : index
    %c0_64 = arith.constant 0 : index
    %60 = vector.load %arg9[%c2_62, %c2_63, %c0_64] : memref<10x10x128xbf16, #tpu.memory_space<vmem>>, vector<8x8x128xbf16>
    %61 = vector.shape_cast %60 : vector<8x8x128xbf16> to vector<64x128xbf16>
    %c1024 = arith.constant 1024 : index
    %c0_65 = arith.constant 0 : index
    %62 = vector.load %arg4[%c1024, %c0_65] : memref<1152x128xbf16, #tpu.memory_space<vmem>>, vector<128x128xbf16>
    %cst_66 = arith.constant dense<0.000000e+00> : vector<64x128xf32>
    %63 = tpu.matmul %61, %62, %cst_66 {dimension_numbers = #tpu.dot_dimension_numbers<[1], [0], [0], [1], [0, 0, 1, 1], [], []>} : vector<64x128xbf16>, vector<128x128xbf16>, vector<64x128xf32> -> vector<64x128xf32>
    %64 = arith.addf %59, %63 : vector<64x128xf32>
    %c0_67 = arith.constant 0 : index
    %c0_68 = arith.constant 0 : index
    %65 = vector.load %arg5[%c0_67, %c0_68] : memref<1x128xf32, #tpu.memory_space<vmem>>, vector<1x128xf32>
    %66 = vector.broadcast %65 : vector<1x128xf32> to vector<64x128xf32>
    %67 = arith.addf %64, %66 : vector<64x128xf32>
    %cst_69 = arith.constant 0.000000e+00 : f32
    %68 = vector.broadcast %cst_69 : f32 to vector<64x128xf32>
    %69 = arith.maximumf %67, %68 : vector<64x128xf32>
    %70 = arith.truncf %69 : vector<64x128xf32> to vector<64x128xbf16>
    %c0_70 = arith.constant 0 : index
    %c0_71 = arith.constant 0 : index
    %71 = vector.load %arg6[%c0_70, %c0_71] : memref<128x128xbf16, #tpu.memory_space<vmem>>, vector<128x128xbf16>
    %cst_72 = arith.constant dense<0.000000e+00> : vector<64x128xf32>
    %72 = tpu.matmul %70, %71, %cst_72 {dimension_numbers = #tpu.dot_dimension_numbers<[1], [0], [0], [1], [0, 0, 1, 1], [], []>} : vector<64x128xbf16>, vector<128x128xbf16>, vector<64x128xf32> -> vector<64x128xf32>
    %c0_73 = arith.constant 0 : index
    %c0_74 = arith.constant 0 : index
    %73 = vector.load %arg7[%c0_73, %c0_74] : memref<1x128xf32, #tpu.memory_space<vmem>>, vector<1x128xf32>
    %74 = vector.broadcast %73 : vector<1x128xf32> to vector<64x128xf32>
    %75 = arith.addf %72, %74 : vector<64x128xf32>
    %76 = arith.addf %15, %75 : vector<64x128xf32>
    %cst_75 = arith.constant 0.000000e+00 : f32
    %77 = vector.broadcast %cst_75 : f32 to vector<64x128xf32>
    %78 = arith.maximumf %76, %77 : vector<64x128xf32>
    %79 = arith.truncf %78 : vector<64x128xf32> to vector<64x128xbf16>
    %c0_76 = arith.constant 0 : index
    %c0_77 = arith.constant 0 : index
    %80 = vector.load %arg8[%c0_76, %c0_77] : memref<64x128xbf16, #tpu.memory_space<vmem>>, vector<64x128xbf16>
    tpu.vector_store %arg8[%c0_76, %c0_77], %79 {strides = array<i32>} : memref<64x128xbf16, #tpu.memory_space<vmem>>, vector<64x128xbf16>,
    return
  }
  func.func @transform_0(%arg0: i32) -> (i32, i32) {
    %c0_i32 = arith.constant 0 : i32
    %c0_i32_0 = arith.constant 0 : i32
    return %arg0, %c0_i32 : i32, i32
  }
  func.func @transform_1(%arg0: i32) -> (i32, i32) {
    %c0_i32 = arith.constant 0 : i32
    %c0_i32_0 = arith.constant 0 : i32
    %c0_i32_1 = arith.constant 0 : i32
    return %c0_i32, %c0_i32_0 : i32, i32
  }
  func.func @transform_2(%arg0: i32) -> (i32, i32) {
    %c0_i32 = arith.constant 0 : i32
    %c0_i32_0 = arith.constant 0 : i32
    %c0_i32_1 = arith.constant 0 : i32
    return %c0_i32, %c0_i32_0 : i32, i32
  }
  func.func @transform_3(%arg0: i32) -> (i32, i32) {
    %c0_i32 = arith.constant 0 : i32
    %c0_i32_0 = arith.constant 0 : i32
    %c0_i32_1 = arith.constant 0 : i32
    return %c0_i32, %c0_i32_0 : i32, i32
  }
  func.func @transform_4(%arg0: i32) -> (i32, i32) {
    %c0_i32 = arith.constant 0 : i32
    %c0_i32_0 = arith.constant 0 : i32
    %c0_i32_1 = arith.constant 0 : i32
    return %c0_i32, %c0_i32_0 : i32, i32
  }
  func.func @transform_5(%arg0: i32) -> (i32, i32) {
    %c0_i32 = arith.constant 0 : i32
    %c0_i32_0 = arith.constant 0 : i32
    %c0_i32_1 = arith.constant 0 : i32
    return %c0_i32, %c0_i32_0 : i32, i32
  }
  func.func @transform_6(%arg0: i32) -> (i32, i32) {
    %c0_i32 = arith.constant 0 : i32
    %c0_i32_0 = arith.constant 0 : i32
    %c0_i32_1 = arith.constant 0 : i32
    return %c0_i32, %c0_i32_0 : i32, i32
  }
  func.func @transform_7(%arg0: i32) -> (i32, i32) {
    %c0_i32 = arith.constant 0 : i32
    %c0_i32_0 = arith.constant 0 : i32
    return %arg0, %c0_i32 : i32, i32
  }
}

</mosaic_0001>

<llo_original>
// kernel: tpu_custom_call.1
$region0: #{tpu_custom_call.1}
  #allocation0 [shape = 'u32[]', space=smem, size = 0x4, offset = 0x4, fixed_abs, tag = 'smem constant byte address 0x4 - core index']
  #allocation1 [shape = 'u32[144,128]{1,0:T(1,128)}', space=vmem, size = 0x12000, scoped, tag = 'internal scratch']
  #allocation2 [shape = 'bf16[10,10,128]{2,1,0:T(8,128)(2,1)}', space=vmem, size = 0xa000, scoped, tag = 'scratch operand']
  %s0 = inlined_call_operand.hbm [shape: bf16[128,128], index: 0, kind: input, shape index: {}]
  %s1 = inlined_call_operand.hbm [shape: bf16[128,256], index: 1, kind: input, shape index: {}]
  %s2 = inlined_call_operand.vmem [shape: f32[1,256], index: 2, kind: input, shape index: {}]
  %s3 = inlined_call_operand.hbm [shape: bf16[1152,128], index: 3, kind: input, shape index: {}]
  %s4 = inlined_call_operand.vmem [shape: f32[1,128], index: 4, kind: input, shape index: {}]
  %s5 = inlined_call_operand.hbm [shape: bf16[128,128], index: 5, kind: input, shape index: {}]
  %s6 = inlined_call_operand.vmem [shape: f32[1,128], index: 6, kind: input, shape index: {}]
  %s7 = inlined_call_operand.hbm [shape: bf16[128,128], index: 7, kind: output, shape index: {}]
  %s8 = sld [smem:[#allocation0]]
  $region77: #{tpu_custom_call.1} parent=0
    _
  %s10 = ssub.s32 1, %s8
  %s11 = scalar_select 0, %s10, %s8
  $region1: #{tpu_custom_call.1} parent=0
    #allocation3 [shape = 'u8[32768]{0}', space=vmem, size = 0x8000, scoped, tag = 'input window, operand 0']
    #allocation4 [shape = 's32[2]{0}', space=sflag, size = 0x8, scoped, tag = 'scoped memory for tpu_custom_call.1']
    #allocation5 [shape = 's32[2]{0}', space=sflag, size = 0x8, scoped, tag = 'scoped memory for tpu_custom_call.1']
    #allocation6 [shape = 'u8[65536]{0}', space=vmem, size = 0x10000, scoped, tag = 'input window, operand 1, single buffered']
    #allocation7 [shape = 's32[1]{0}', space=sflag, size = 0x4, scoped, tag = 'scoped memory for tpu_custom_call.1']
    #allocation8 [shape = 'u8[294912]{0}', space=vmem, size = 0x48000, scoped, tag = 'input window, operand 3, single buffered']
    #allocation9 [shape = 'u8[32768]{0}', space=vmem, size = 0x8000, scoped, tag = 'input window, operand 5, single buffered']
    #allocation10 [shape = 's32[1]{0}', space=sflag, size = 0x4, scoped, tag = 'scoped memory for tpu_custom_call.1']
    #allocation11 [shape = 'u8[32768]{0}', space=vmem, size = 0x8000, scoped, tag = 'output window, operand 0']
    %12 = vsyncpa [#allocation4], 0
    %s13 = scalar_lea.sflag [#allocation4], 1
    %14 = vsyncpa %s13, 0
    %15 = vsyncpa [#allocation7], 0
    %16 = vsyncpa [#allocation10], 0
    %17 = vsyncpa [#allocation5], 0
    %s18 = scalar_lea.sflag [#allocation5], 1
    %19 = vsyncpa %s18, 0
    loop: start=0, step=1, limit=4
    $region2: #{tpu_custom_call.1} parent=1 // loop_pre_header
      _
    $region3: #{tpu_custom_call.1} parent=1 // loop_header
      %s21 = sphi 0, %s25
      %p22 = scmp.ge.s32.totalorder %s21, 4
      %s31 = sphi 0, %s33
      %s34 = sphi 0, %s31
      %s35 = sphi 0, %s34
      %s51 = sphi 0, %s35
      %s55 = sphi 0, %s55
      %s57 = sphi 0, %s55
      %s58 = sphi 0, %s57
      %s72 = sphi 0, %s58
      %s76 = sphi 0, %s76
      %s78 = sphi 0, %s76
      %s79 = sphi 0, %s78
      %s93 = sphi 0, %s79
      %s97 = sphi 0, %s97
      %s99 = sphi 0, %s97
      %s100 = sphi 0, %s99
      %s114 = sphi 0, %s100
      %s118 = sphi 0, %s118
      %s120 = sphi 0, %s118
      %s121 = sphi 0, %s120
      %s135 = sphi 0, %s121
      %s139 = sphi 0, %s139
      %s141 = sphi 0, %s139
      %s142 = sphi 0, %s141
      %s156 = sphi 0, %s142
      %s160 = sphi 0, %s160
      %s162 = sphi 0, %s160
      %s163 = sphi 0, %s162
      %s177 = sphi 0, %s163
      %s183 = sphi 0, %s185
      %s186 = sphi 0, %s183
      %s187 = sphi 0, %s186
      %s203 = sphi 0, %s187
    $region4: #{tpu_custom_call.1} parent=1 // loop_header_branch
      %24 = sbr.rel (%p22) target = $region8
    $region5: #{tpu_custom_call.1} parent=1 // loop_body
      %s26 = ssub.s32 %s21, 1
      %s27 = ssub.s32 %s21, 2
      %s28 = sadd.s32 %s21, 1
      %s29 = ssub.s32 %s21, %s28
      %p30 = scmp.eq.s32.totalorder %s29, 0
      %s32 = sadd.s32 %s31, 1
      %s33 = scalar_select %p30, %s31, %s32
      %p36 = pneg %p30
      %p37 = scmp.eq.s32.totalorder %s21, 1
      %p38 = por %p36, %p37
      %p39 = scmp.ne.s32.totalorder %s31, %s34
      %p40 = scmp.eq.s32.totalorder %s21, 0
      %p41 = por %p39, %p40
      %p42 = scmp.ne.s32.totalorder %s31, %s34
      %p43 = scmp.eq.s32.totalorder %s26, 1
      %p44 = por %p42, %p43
      %p45 = scmp.ne.s32.totalorder %s34, %s35
      %p46 = scmp.eq.s32.totalorder %s26, 0
      %p47 = por %p45, %p46
      %p48 = scmp.ne.s32.totalorder %s34, %s35
      %p49 = scmp.eq.s32.totalorder %s27, 1
      %p50 = por %p48, %p49
      %p52 = scmp.ne.s32.totalorder %s35, %s51
      %p53 = scmp.eq.s32.totalorder %s27, 0
      %p54 = por %p52, %p53
      %s56 = sadd.s32 %s55, 1
      %p59 = scmp.eq.s32.totalorder %s21, 1
      %p60 = scmp.ne.s32.totalorder %s55, %s57
      %p61 = scmp.eq.s32.totalorder %s21, 0
      %p62 = por %p60, %p61
      %p63 = scmp.ne.s32.totalorder %s55, %s57
      %p64 = scmp.eq.s32.totalorder %s26, 1
      %p65 = por %p63, %p64
      %p66 = scmp.ne.s32.totalorder %s57, %s58
      %p67 = scmp.eq.s32.totalorder %s26, 0
      %p68 = por %p66, %p67
      %p69 = scmp.ne.s32.totalorder %s57, %s58
      %p70 = scmp.eq.s32.totalorder %s27, 1
      %p71 = por %p69, %p70
      %p73 = scmp.ne.s32.totalorder %s58, %s72
      %p74 = scmp.eq.s32.totalorder %s27, 0
      %p75 = por %p73, %p74
      %s77 = sadd.s32 %s76, 1
      %p80 = scmp.eq.s32.totalorder %s21, 1
      %p81 = scmp.ne.s32.totalorder %s76, %s78
      %p82 = scmp.eq.s32.totalorder %s21, 0
      %p83 = por %p81, %p82
      %p84 = scmp.ne.s32.totalorder %s76, %s78
      %p85 = scmp.eq.s32.totalorder %s26, 1
      %p86 = por %p84, %p85
      %p87 = scmp.ne.s32.totalorder %s78, %s79
      %p88 = scmp.eq.s32.totalorder %s26, 0
      %p89 = por %p87, %p88
      %p90 = scmp.ne.s32.totalorder %s78, %s79
      %p91 = scmp.eq.s32.totalorder %s27, 1
      %p92 = por %p90, %p91
      %p94 = scmp.ne.s32.totalorder %s79, %s93
      %p95 = scmp.eq.s32.totalorder %s27, 0
      %p96 = por %p94, %p95
      %s98 = sadd.s32 %s97, 1
      %p101 = scmp.eq.s32.totalorder %s21, 1
      %p102 = scmp.ne.s32.totalorder %s97, %s99
      %p103 = scmp.eq.s32.totalorder %s21, 0
      %p104 = por %p102, %p103
      %p105 = scmp.ne.s32.totalorder %s97, %s99
      %p106 = scmp.eq.s32.totalorder %s26, 1
      %p107 = por %p105, %p106
      %p108 = scmp.ne.s32.totalorder %s99, %s100
      %p109 = scmp.eq.s32.totalorder %s26, 0
      %p110 = por %p108, %p109
      %p111 = scmp.ne.s32.totalorder %s99, %s100
      %p112 = scmp.eq.s32.totalorder %s27, 1
      %p113 = por %p111, %p112
      %p115 = scmp.ne.s32.totalorder %s100, %s114
      %p116 = scmp.eq.s32.totalorder %s27, 0
      %p117 = por %p115, %p116
      %s119 = sadd.s32 %s118, 1
      %p122 = scmp.eq.s32.totalorder %s21, 1
      %p123 = scmp.ne.s32.totalorder %s118, %s120
      %p124 = scmp.eq.s32.totalorder %s21, 0
      %p125 = por %p123, %p124
      %p126 = scmp.ne.s32.totalorder %s118, %s120
      %p127 = scmp.eq.s32.totalorder %s26, 1
      %p128 = por %p126, %p127
      %p129 = scmp.ne.s32.totalorder %s120, %s121
      %p130 = scmp.eq.s32.totalorder %s26, 0
      %p131 = por %p129, %p130
      %p132 = scmp.ne.s32.totalorder %s120, %s121
      %p133 = scmp.eq.s32.totalorder %s27, 1
      %p134 = por %p132, %p133
      %p136 = scmp.ne.s32.totalorder %s121, %s135
      %p137 = scmp.eq.s32.totalorder %s27, 0
      %p138 = por %p136, %p137
      %s140 = sadd.s32 %s139, 1
      %p143 = scmp.eq.s32.totalorder %s21, 1
      %p144 = scmp.ne.s32.totalorder %s139, %s141
      %p145 = scmp.eq.s32.totalorder %s21, 0
      %p146 = por %p144, %p145
      %p147 = scmp.ne.s32.totalorder %s139, %s141
      %p148 = scmp.eq.s32.totalorder %s26, 1
      %p149 = por %p147, %p148
      %p150 = scmp.ne.s32.totalorder %s141, %s142
      %p151 = scmp.eq.s32.totalorder %s26, 0
      %p152 = por %p150, %p151
      %p153 = scmp.ne.s32.totalorder %s141, %s142
      %p154 = scmp.eq.s32.totalorder %s27, 1
      %p155 = por %p153, %p154
      %p157 = scmp.ne.s32.totalorder %s142, %s156
      %p158 = scmp.eq.s32.totalorder %s27, 0
      %p159 = por %p157, %p158
      %s161 = sadd.s32 %s160, 1
      %p164 = scmp.eq.s32.totalorder %s21, 1
      %p165 = scmp.ne.s32.totalorder %s160, %s162
      %p166 = scmp.eq.s32.totalorder %s21, 0
      %p167 = por %p165, %p166
      %p168 = scmp.ne.s32.totalorder %s160, %s162
      %p169 = scmp.eq.s32.totalorder %s26, 1
      %p170 = por %p168, %p169
      %p171 = scmp.ne.s32.totalorder %s162, %s163
      %p172 = scmp.eq.s32.totalorder %s26, 0
      %p173 = por %p171, %p172
      %p174 = scmp.ne.s32.totalorder %s162, %s163
      %p175 = scmp.eq.s32.totalorder %s27, 1
      %p176 = por %p174, %p175
      %p178 = scmp.ne.s32.totalorder %s163, %s177
      %p179 = scmp.eq.s32.totalorder %s27, 0
      %p180 = por %p178, %p179
      %s181 = ssub.s32 %s21, %s28
      %p182 = scmp.eq.s32.totalorder %s181, 0
      %s184 = sadd.s32 %s183, 1
      %s185 = scalar_select %p182, %s183, %s184
      %p188 = pneg %p182
      %p189 = scmp.eq.s32.totalorder %s21, 1
      %p190 = por %p188, %p189
      %p191 = scmp.ne.s32.totalorder %s183, %s186
      %p192 = scmp.eq.s32.totalorder %s21, 0
      %p193 = por %p191, %p192
      %p194 = scmp.ne.s32.totalorder %s183, %s186
      %p195 = scmp.eq.s32.totalorder %s26, 1
      %p196 = por %p194, %p195
      %p197 = scmp.ne.s32.totalorder %s186, %s187
      %p198 = scmp.eq.s32.totalorder %s26, 0
      %p199 = por %p197, %p198
      %p200 = scmp.ne.s32.totalorder %s186, %s187
      %p201 = scmp.eq.s32.totalorder %s27, 1
      %p202 = por %p200, %p201
      %p204 = scmp.ne.s32.totalorder %s187, %s203
      %p205 = scmp.eq.s32.totalorder %s27, 0
      %p206 = por %p204, %p205
      %p207 = scmp.le.s32.totalorder 1, %s21
      %p208 = scmp.lt.s32.totalorder %s21, 3
      %p209 = pnand %p207, %p208
      %p210 = pneg %p209
      // Predicated region
      $region9: #{tpu_custom_call.1} parent=5 // pred_check
        _
      $region10: #{tpu_custom_call.1} parent=5 // pred_check_branch
        %212 = sbr.rel (%p209) target = $region12
      $region11: #{tpu_custom_call.1} parent=5 // pred_region
        %s213 = ssub.s32 %s21, 1
        // Predicated region
        $region13: #{tpu_custom_call.1} parent=11 // pred_check
          %p214 = pneg %p68
        $region14: #{tpu_custom_call.1} parent=11 // pred_check_branch
          %216 = sbr.rel (%p214) target = $region16
        $region15: #{tpu_custom_call.1} parent=11 // pred_region
          %s218 = ssub.s32 2048, 2048
          %219 = vsyncadd [#allocation7], %s218
          %s220 = sshll.u32 [#allocation6], 4
          %s221 = int_to_ptr.vmem [resolvable:$true] %s220
          %226 = dma.hbm_to_vmem [thread:$0]  %s1, 2048, %s221, [#allocation7], 128, 128, 8
        $region16: #{tpu_custom_call.1} parent=11 // pred_fallthru
          _
        // Predicated region
        $region17: #{tpu_custom_call.1} parent=11 // pred_check
          %p227 = pneg %p89
        $region18: #{tpu_custom_call.1} parent=11 // pred_check_branch
          %229 = sbr.rel (%p227) target = $region20
        $region19: #{tpu_custom_call.1} parent=11 // pred_region
          _
        $region20: #{tpu_custom_call.1} parent=11 // pred_fallthru
          _
        // Predicated region
        $region21: #{tpu_custom_call.1} parent=11 // pred_check
          %p230 = pneg %p110
        $region22: #{tpu_custom_call.1} parent=11 // pred_check_branch
          %232 = sbr.rel (%p230) target = $region24
        $region23: #{tpu_custom_call.1} parent=11 // pred_region
          %s234 = ssub.s32 9216, 9216
          %235 = vsyncadd [#allocation7], %s234
          %s236 = sshll.u32 [#allocation8], 4
          %s237 = int_to_ptr.vmem [resolvable:$true] %s236
          %242 = dma.hbm_to_vmem [thread:$0]  %s3, 9216, %s237, [#allocation7], 64, 64, 4
        $region24: #{tpu_custom_call.1} parent=11 // pred_fallthru
          _
        // Predicated region
        $region25: #{tpu_custom_call.1} parent=11 // pred_check
          %p243 = pneg %p131
        $region26: #{tpu_custom_call.1} parent=11 // pred_check_branch
          %245 = sbr.rel (%p243) target = $region28
        $region27: #{tpu_custom_call.1} parent=11 // pred_region
          _
        $region28: #{tpu_custom_call.1} parent=11 // pred_fallthru
          _
        // Predicated region
        $region29: #{tpu_custom_call.1} parent=11 // pred_check
          %p246 = pneg %p152
        $region30: #{tpu_custom_call.1} parent=11 // pred_check_branch
          %248 = sbr.rel (%p246) target = $region32
        $region31: #{tpu_custom_call.1} parent=11 // pred_region
          %s250 = ssub.s32 1024, 1024
          %251 = vsyncadd [#allocation10], %s250
          %s252 = sshll.u32 [#allocation9], 4
          %s253 = int_to_ptr.vmem [resolvable:$true] %s252
          %258 = dma.hbm_to_vmem [thread:$0]  %s5, 1024, %s253, [#allocation10], 64, 64, 4
        $region32: #{tpu_custom_call.1} parent=11 // pred_fallthru
          _
        // Predicated region
        $region33: #{tpu_custom_call.1} parent=11 // pred_check
          %p259 = pneg %p173
        $region34: #{tpu_custom_call.1} parent=11 // pred_check_branch
          %261 = sbr.rel (%p259) target = $region36
        $region35: #{tpu_custom_call.1} parent=11 // pred_region
          _
        $region36: #{tpu_custom_call.1} parent=11 // pred_fallthru
          _
      $region12: #{tpu_custom_call.1} parent=5 // pred_fallthru
        _
      %p262 = scmp.lt.s32.totalorder %s21, 2
      // Predicated region
      $region37: #{tpu_custom_call.1} parent=5 // pred_check
        %p263 = pneg %p262
      $region38: #{tpu_custom_call.1} parent=5 // pred_check_branch
        %265 = sbr.rel (%p263) target = $region40
      $region39: #{tpu_custom_call.1} parent=5 // pred_region
        // Predicated region
        $region41: #{tpu_custom_call.1} parent=39 // pred_check
          %p266 = pneg %p41
        $region42: #{tpu_custom_call.1} parent=39 // pred_check_branch
          %268 = sbr.rel (%p266) target = $region44
        $region43: #{tpu_custom_call.1} parent=39 // pred_region
          %s269 = sand.u32 %s31, 1
          %s270 = scalar_lea.sflag [#allocation4], %s269
          %s271 = sand.u32 %s31, 1
          %s272 = smul.addr %s271, 32
          %s273 = scalar_lea.vmem [#allocation3], %s272
          %s274 = smul.u32 8, %s21
          %s276 = ssub.s32 512, 512
          %277 = vsyncadd %s270, %s276
          %s278 = smul.addr %s274, 64
          %s279 = scalar_lea.hbm %s0, %s278
          %s280 = sshll.u32 %s273, 4
          %s281 = int_to_ptr.vmem [resolvable:$true] %s280
          %286 = dma.hbm_to_vmem [thread:$0]  %s279, 512, %s281, %s270, 64, 64, 4
        $region44: #{tpu_custom_call.1} parent=39 // pred_fallthru
          _
      $region40: #{tpu_custom_call.1} parent=5 // pred_fallthru
        _
      %p287 = scmp.le.s32.totalorder 1, %s21
      %p288 = scmp.lt.s32.totalorder %s21, 3
      %p289 = pnand %p287, %p288
      %p290 = pneg %p289
      // Predicated region
      $region45: #{tpu_custom_call.1} parent=5 // pred_check
        _
      $region46: #{tpu_custom_call.1} parent=5 // pred_check_branch
        %292 = sbr.rel (%p289) target = $region48
      $region47: #{tpu_custom_call.1} parent=5 // pred_region
        %s293 = ssub.s32 %s21, 1
        %s294 = sand.u32 %s34, 1
        %s295 = scalar_lea.sflag [#allocation4], %s294
        %s296 = sand.u32 %s34, 1
        %s297 = smul.addr %s296, 32
        %s298 = scalar_lea.vmem [#allocation3], %s297
        // Predicated region
        $region49: #{tpu_custom_call.1} parent=47 // pred_check
          %p299 = pneg %p47
        $region50: #{tpu_custom_call.1} parent=47 // pred_check_branch
          %301 = sbr.rel (%p299) target = $region52
        $region51: #{tpu_custom_call.1} parent=47 // pred_region
          %302 = dma.done %s295, 512
        $region52: #{tpu_custom_call.1} parent=47 // pred_fallthru
          _
        // Predicated region
        $region53: #{tpu_custom_call.1} parent=47 // pred_check
          %p303 = pneg %p68
        $region54: #{tpu_custom_call.1} parent=47 // pred_check_branch
          %305 = sbr.rel (%p303) target = $region56
        $region55: #{tpu_custom_call.1} parent=47 // pred_region
          %306 = dma.done [#allocation7], 2048
        $region56: #{tpu_custom_call.1} parent=47 // pred_fallthru
          _
        // Predicated region
        $region57: #{tpu_custom_call.1} parent=47 // pred_check
          %p307 = pneg %p110
        $region58: #{tpu_custom_call.1} parent=47 // pred_check_branch
          %309 = sbr.rel (%p307) target = $region60
        $region59: #{tpu_custom_call.1} parent=47 // pred_region
          %310 = dma.done [#allocation7], 9216
        $region60: #{tpu_custom_call.1} parent=47 // pred_fallthru
          _
        // Predicated region
        $region61: #{tpu_custom_call.1} parent=47 // pred_check
          %p311 = pneg %p152
        $region62: #{tpu_custom_call.1} parent=47 // pred_check_branch
          %313 = sbr.rel (%p311) target = $region64
        $region63: #{tpu_custom_call.1} parent=47 // pred_region
          %314 = dma.done [#allocation10], 1024
        $region64: #{tpu_custom_call.1} parent=47 // pred_fallthru
          _
        %s315 = sand.u32 %s34, 1
        %s316 = scalar_lea.sflag [#allocation4], %s315
        %s317 = sand.u32 %s34, 1
        %s318 = smul.addr %s317, 32
        %s319 = scalar_lea.vmem [#allocation3], %s318
        %p320 = pneg %p47
        %p321 = pneg %p44
        %p322 = pneg %p68
        %p323 = pneg %p65
        %p324 = pneg %p89
        %p325 = pneg %p86
        %p326 = pneg %p110
        %p327 = pneg %p107
        %p328 = pneg %p131
        %p329 = pneg %p128
        %p330 = pneg %p152
        %p331 = pneg %p149
        %p332 = pneg %p173
        %p333 = pneg %p170
        %p334 = pneg %p199
        %p335 = pneg %p196
        %s336 = sand.u32 %s186, 1
        %s337 = scalar_lea.sflag [#allocation5], %s336
        %s338 = sand.u32 %s186, 1
        %s339 = smul.addr %s338, 32
        %s340 = scalar_lea.vmem [#allocation11], %s339
        %s341 = smul.u32 8, %s26
        %s342 = smul.u32 8, %s26
        %344 = vst [vmem:[#allocation2] sm:$0xf] 0
        %345 = vst [vmem:[#allocation2 + $0x4] sm:$0x1] 0
        %s346 = scalar_lea.vmem [#allocation2], 72
        %347 = vst [vmem:[%s346] sm:$0xf] 0
        %348 = vst [vmem:[%s346 + $0x4] sm:$0x1] 0
        %s349 = scalar_lea.vmem [#allocation2], 8
        %vm350 = vcmask 1040384
        %vm351 = vsmask.f32 256
        %vm352 = vmand %vm350, %vm351
        %v353 = vld [vmem:[%s349] sm:$0x1]
        %v354 = vsel %vm352, 0, %v353
        %355 = vst [vmem:[%s349] sm:$0x1] %v354
        %v356 = vld [vmem:[%s349 + $0x8] sm:$0x1]
        %v357 = vsel %vm352, 0, %v356
        %358 = vst [vmem:[%s349 + $0x8] sm:$0x1] %v357
        %v359 = vld [vmem:[%s349 + $0x10] sm:$0x1]
        %v360 = vsel %vm352, 0, %v359
        %361 = vst [vmem:[%s349 + $0x10] sm:$0x1] %v360
        %v362 = vld [vmem:[%s349 + $0x18] sm:$0x1]
        %v363 = vsel %vm352, 0, %v362
        %364 = vst [vmem:[%s349 + $0x18] sm:$0x1] %v363
        %v365 = vld [vmem:[%s349 + $0x20] sm:$0x1]
        %v366 = vsel %vm352, 0, %v365
        %367 = vst [vmem:[%s349 + $0x20] sm:$0x1] %v366
        %v368 = vld [vmem:[%s349 + $0x28] sm:$0x1]
        %v369 = vsel %vm352, 0, %v368
        %370 = vst [vmem:[%s349 + $0x28] sm:$0x1] %v369
        %v371 = vld [vmem:[%s349 + $0x30] sm:$0x1]
        %v372 = vsel %vm352, 0, %v371
        %373 = vst [vmem:[%s349 + $0x30] sm:$0x1] %v372
        %v374 = vld [vmem:[%s349 + $0x38] sm:$0x1]
        %v375 = vsel %vm352, 0, %v374
        %376 = vst [vmem:[%s349 + $0x38] sm:$0x1] %v375
        %vm377 = vsmask.f32 7938
        %vm378 = vmand %vm350, %vm377
        %v379 = vld [vmem:[%s349 + $0x4] sm:$0x1]
        %v380 = vsel %vm378, 0, %v379
        %381 = vst [vmem:[%s349 + $0x4] sm:$0x1] %v380
        %v382 = vld [vmem:[%s349 + $0xc] sm:$0x1]
        %v383 = vsel %vm378, 0, %v382
        %384 = vst [vmem:[%s349 + $0xc] sm:$0x1] %v383
        %v385 = vld [vmem:[%s349 + $0x14] sm:$0x1]
        %v386 = vsel %vm378, 0, %v385
        %387 = vst [vmem:[%s349 + $0x14] sm:$0x1] %v386
        %v388 = vld [vmem:[%s349 + $0x1c] sm:$0x1]
        %v389 = vsel %vm378, 0, %v388
        %390 = vst [vmem:[%s349 + $0x1c] sm:$0x1] %v389
        %v391 = vld [vmem:[%s349 + $0x24] sm:$0x1]
        %v392 = vsel %vm378, 0, %v391
        %393 = vst [vmem:[%s349 + $0x24] sm:$0x1] %v392
        %v394 = vld [vmem:[%s349 + $0x2c] sm:$0x1]
        %v395 = vsel %vm378, 0, %v394
        %396 = vst [vmem:[%s349 + $0x2c] sm:$0x1] %v395
        %v397 = vld [vmem:[%s349 + $0x34] sm:$0x1]
        %v398 = vsel %vm378, 0, %v397
        %399 = vst [vmem:[%s349 + $0x34] sm:$0x1] %v398
        %v400 = vld [vmem:[%s349 + $0x3c] sm:$0x1]
        %v401 = vsel %vm378, 0, %v400
        %402 = vst [vmem:[%s349 + $0x3c] sm:$0x1] %v401
        %v403 = vld [vmem:[%s298] sm:$0xf]
        %v404 = vld [vmem:[%s298 + $0x4] sm:$0xf]
        %v405 = vld [vmem:[%s298 + $0x8] sm:$0xf]
        %v406 = vld [vmem:[%s298 + $0xc] sm:$0xf]
        %v407 = vld [vmem:[%s298 + $0x10] sm:$0xf]
        %v408 = vld [vmem:[%s298 + $0x14] sm:$0xf]
        %v409 = vld [vmem:[%s298 + $0x18] sm:$0xf]
        %v410 = vld [vmem:[%s298 + $0x1c] sm:$0xf]
        %v411 = vld [vmem:[#allocation6] sm:$0xff]
        %v412 = vld [vmem:[#allocation6 + $0x8] sm:$0xff]
        %v413 = vld [vmem:[#allocation6 + $0x10] sm:$0xff]
        %v414 = vld [vmem:[#allocation6 + $0x18] sm:$0xff]
        %v415 = vld [vmem:[#allocation6 + $0x20] sm:$0xff]
        %v416 = vld [vmem:[#allocation6 + $0x28] sm:$0xff]
        %v417 = vld [vmem:[#allocation6 + $0x30] sm:$0xff]
        %v418 = vld [vmem:[#allocation6 + $0x38] sm:$0xff]
        %v419 = vld [vmem:[#allocation6 + $0x40] sm:$0xff]
        %v420 = vld [vmem:[#allocation6 + $0x48] sm:$0xff]
        %v421 = vld [vmem:[#allocation6 + $0x50] sm:$0xff]
        %v422 = vld [vmem:[#allocation6 + $0x58] sm:$0xff]
        %v423 = vld [vmem:[#allocation6 + $0x60] sm:$0xff]
        %v424 = vld [vmem:[#allocation6 + $0x68] sm:$0xff]
        %v425 = vld [vmem:[#allocation6 + $0x70] sm:$0xff]
        %v426 = vld [vmem:[#allocation6 + $0x78] sm:$0xff]
        %v427 = vld [vmem:[%s2] sm:$0x3]
        %v429 = vlaneseq
        %v430 = vshrl.u32 %v429, 7
        %v431 = vsub.s32 0, %v430
        %v432 = vrot.slane %v427, %v431
        %v433 = vlaneseq
        %v434 = vshrl.u32 %v433, 7
        %v435 = vsub.s32 1, %v434
        %v436 = vrot.slane %v427, %v435
        %v447 = vunpack.c.l.b16 %v403
        %v448 = vunpack.c.l.b16 %v404
        %v449 = vunpack.c.l.b16 %v405
        %v450 = vunpack.c.l.b16 %v406
        %v451 = vunpack.c.l.b16 %v407
        %v452 = vunpack.c.l.b16 %v408
        %v453 = vunpack.c.l.b16 %v409
        %v454 = vunpack.c.l.b16 %v410
        %v455 = vpack.c.b16 %v448, %v447
        %v456 = vpack.c.b16 %v450, %v449
        %v457 = vpack.c.b16 %v452, %v451
        %v458 = vpack.c.b16 %v454, %v453
        %v479 = vunpack.c.l.b16 %v411
        %v480 = vunpack.c.h.b16 %v411
        %v481 = vunpack.c.l.b16 %v412
        %v482 = vunpack.c.h.b16 %v412
        %v483 = vunpack.c.l.b16 %v413
        %v484 = vunpack.c.h.b16 %v413
        %v485 = vunpack.c.l.b16 %v414
        %v486 = vunpack.c.h.b16 %v414
        %v487 = vunpack.c.l.b16 %v415
        %v488 = vunpack.c.h.b16 %v415
        %v489 = vunpack.c.l.b16 %v416
        %v490 = vunpack.c.h.b16 %v416
        %v491 = vunpack.c.l.b16 %v417
        %v492 = vunpack.c.h.b16 %v417
        %v493 = vunpack.c.l.b16 %v418
        %v494 = vunpack.c.h.b16 %v418
        %v495 = vunpack.c.l.b16 %v419
        %v496 = vunpack.c.h.b16 %v419
        %v497 = vunpack.c.l.b16 %v420
        %v498 = vunpack.c.h.b16 %v420
        %v499 = vunpack.c.l.b16 %v421
        %v500 = vunpack.c.h.b16 %v421
        %v501 = vunpack.c.l.b16 %v422
        %v502 = vunpack.c.h.b16 %v422
        %v503 = vunpack.c.l.b16 %v423
        %v504 = vunpack.c.h.b16 %v423
        %v505 = vunpack.c.l.b16 %v424
        %v506 = vunpack.c.h.b16 %v424
        %v507 = vunpack.c.l.b16 %v425
        %v508 = vunpack.c.h.b16 %v425
        %v509 = vunpack.c.l.b16 %v426
        %v510 = vunpack.c.h.b16 %v426
        %v511 = vpack.c.b16 %v481, %v479
        %v512 = vpack.c.b16 %v482, %v480
        %v513 = vpack.c.b16 %v485, %v483
        %v514 = vpack.c.b16 %v486, %v484
        %v515 = vpack.c.b16 %v489, %v487
        %v516 = vpack.c.b16 %v490, %v488
        %v517 = vpack.c.b16 %v493, %v491
        %v518 = vpack.c.b16 %v494, %v492
        %v519 = vpack.c.b16 %v497, %v495
        %v520 = vpack.c.b16 %v498, %v496
        %v521 = vpack.c.b16 %v501, %v499
        %v522 = vpack.c.b16 %v502, %v500
        %v523 = vpack.c.b16 %v505, %v503
        %v524 = vpack.c.b16 %v506, %v504
        %v525 = vpack.c.b16 %v509, %v507
        %v526 = vpack.c.b16 %v510, %v508
        %543 = vmatprep.subr.bf16.mxu0 %v526
        %544 = vmatpush1.bf16.msra.mxu0 %v525
        %545 = vmatprep.subr.bf16.mxu0 %v524
        %546 = vmatpush1.bf16.msra.mxu0 %v523
        %547 = vmatprep.subr.bf16.mxu0 %v522
        %548 = vmatpush1.bf16.msra.mxu0 %v521
        %549 = vmatprep.subr.bf16.mxu0 %v520
        %550 = vmatpush1.bf16.msra.mxu0 %v519
        %551 = vmatprep.subr.bf16.mxu0 %v518
        %552 = vmatpush1.bf16.msra.mxu0 %v517
        %553 = vmatprep.subr.bf16.mxu0 %v516
        %554 = vmatpush1.bf16.msra.mxu0 %v515
        %555 = vmatprep.subr.bf16.mxu0 %v514
        %556 = vmatpush1.bf16.msra.mxu0 %v513
        %557 = vmatprep.subr.bf16.mxu0 %v512
        %558 = vmatpush1.bf16.msra.mxu0 %v511
        %559 = vmatprep.subr.bf16.mxu0 0
        %560 = vmatpush2.bf16.msra.mxu0 0
        %561 = vmatprep.subr.bf16.mxu0 0
        %562 = vmatpush2.bf16.msra.mxu0 0
        %563 = vmatprep.subr.bf16.mxu0 0
        %564 = vmatpush2.bf16.msra.mxu0 0
        %565 = vmatprep.subr.bf16.mxu0 0
        %566 = vmatpush2.bf16.msra.mxu0 0
        %567 = vmatprep.subr.bf16.mxu0 0
        %568 = vmatpush2.bf16.msra.mxu0 0
        %569 = vmatprep.subr.bf16.mxu0 0
        %570 = vmatpush2.bf16.msra.mxu0 0
        %571 = vmatprep.subr.bf16.mxu0 0
        %572 = vmatpush2.bf16.msra.mxu0 0
        %573 = vmatprep.subr.bf16.mxu0 0
        %574 = vmatpush2.bf16.msra.mxu0 0
        %575 = vmatprep.mubr.bf16.mxu0 0
        %576 = vmatmul.mubr.bf16.gmra.mxu0 %v455
        %v577 = vpop.f32.mrf.mxu0
        %v578 = vadd.f32 %v432, %v577
        %v579 = vpop.f32.mrf.mxu0
        %v580 = vadd.f32 %v436, %v579
        %v581 = vpop.f32.mrf.mxu0
        %v582 = vadd.f32 %v432, %v581
        %v583 = vpop.f32.mrf.mxu0
        %v584 = vadd.f32 %v436, %v583
        %585 = vmatprep.mubr.bf16.mxu0 0
        %586 = vmatmul.mubr.bf16.gmra.mxu0 %v456
        %v587 = vpop.f32.mrf.mxu0
        %v588 = vadd.f32 %v432, %v587
        %v589 = vpop.f32.mrf.mxu0
        %v590 = vadd.f32 %v436, %v589
        %v591 = vpop.f32.mrf.mxu0
        %v592 = vadd.f32 %v432, %v591
        %v593 = vpop.f32.mrf.mxu0
        %v594 = vadd.f32 %v436, %v593
        %595 = vmatprep.mubr.bf16.mxu0 0
        %596 = vmatmul.mubr.bf16.gmra.mxu0 %v457
        %v597 = vpop.f32.mrf.mxu0
        %v598 = vadd.f32 %v432, %v597
        %v599 = vpop.f32.mrf.mxu0
        %v600 = vadd.f32 %v436, %v599
        %v601 = vpop.f32.mrf.mxu0
        %v602 = vadd.f32 %v432, %v601
        %v603 = vpop.f32.mrf.mxu0
        %v604 = vadd.f32 %v436, %v603
        %605 = vmatprep.mubr.bf16.mxu0 0
        %606 = vmatmul.mubr.bf16.gmra.mxu0 %v458
        %v607 = vpop.f32.mrf.mxu0
        %v608 = vadd.f32 %v432, %v607
        %v609 = vpop.f32.mrf.mxu0
        %v610 = vadd.f32 %v436, %v609
        %v611 = vpop.f32.mrf.mxu0
        %v612 = vadd.f32 %v432, %v611
        %v613 = vpop.f32.mrf.mxu0
        %v614 = vadd.f32 %v436, %v613
        %615 = vdwg.mxu0
        %v616 = vmax.f32 %v578, 0.0
        %v617 = vmax.f32 %v582, 0.0
        %v618 = vmax.f32 %v588, 0.0
        %v619 = vmax.f32 %v592, 0.0
        %v620 = vmax.f32 %v598, 0.0
        %v621 = vmax.f32 %v602, 0.0
        %v622 = vmax.f32 %v608, 0.0
        %v623 = vmax.f32 %v612, 0.0
        %v624 = vpack.c.bf16 %v616, %v616
        %v625 = vpack.c.bf16 %v617, %v617
        %v626 = vpack.c.bf16 %v618, %v618
        %v627 = vpack.c.bf16 %v619, %v619
        %v628 = vpack.c.bf16 %v620, %v620
        %v629 = vpack.c.bf16 %v621, %v621
        %v630 = vpack.c.bf16 %v622, %v622
        %v631 = vpack.c.bf16 %v623, %v623
        %v640 = vunpack.c.l.b16 %v624
        %v641 = vunpack.c.l.b16 %v625
        %v642 = vunpack.c.l.b16 %v626
        %v643 = vunpack.c.l.b16 %v627
        %v644 = vunpack.c.l.b16 %v628
        %v645 = vunpack.c.l.b16 %v629
        %v646 = vunpack.c.l.b16 %v630
        %v647 = vunpack.c.l.b16 %v631
        %v648 = vpack.c.b16 %v640, %v640
        %v649 = vpack.c.b16 %v641, %v641
        %v650 = vpack.c.b16 %v642, %v642
        %v651 = vpack.c.b16 %v643, %v643
        %v652 = vpack.c.b16 %v644, %v644
        %v653 = vpack.c.b16 %v645, %v645
        %v654 = vpack.c.b16 %v646, %v646
        %v655 = vpack.c.b16 %v647, %v647
        %v657 = vshrl.u32 %v648, 16
        %v659 = vrot.slane %v657, 7
        %v660 = vshll.u32 %v648, 16
        %v662 = vor.u32 %v659, %v660
        %v663 = vrot.slane %v659, 4
        %v665 = vshrl.u32 %v649, 16
        %v667 = vrot.slane %v665, 7
        %v668 = vshll.u32 %v649, 16
        %v670 = vor.u32 %v667, %v668
        %v671 = vrot.slane %v667, 4
        %v673 = vshrl.u32 %v650, 16
        %v675 = vrot.slane %v673, 7
        %v676 = vshll.u32 %v650, 16
        %v678 = vor.u32 %v675, %v676
        %v679 = vrot.slane %v675, 4
        %v681 = vshrl.u32 %v651, 16
        %v683 = vrot.slane %v681, 7
        %v684 = vshll.u32 %v651, 16
        %v686 = vor.u32 %v683, %v684
        %v687 = vrot.slane %v683, 4
        %v689 = vshrl.u32 %v652, 16
        %v691 = vrot.slane %v689, 7
        %v692 = vshll.u32 %v652, 16
        %v694 = vor.u32 %v691, %v692
        %v695 = vrot.slane %v691, 4
        %v697 = vshrl.u32 %v653, 16
        %v699 = vrot.slane %v697, 7
        %v700 = vshll.u32 %v653, 16
        %v702 = vor.u32 %v699, %v700
        %v703 = vrot.slane %v699, 4
        %v705 = vshrl.u32 %v654, 16
        %v707 = vrot.slane %v705, 7
        %v708 = vshll.u32 %v654, 16
        %v710 = vor.u32 %v707, %v708
        %v711 = vrot.slane %v707, 4
        %v713 = vshrl.u32 %v655, 16
        %v715 = vrot.slane %v713, 7
        %v716 = vshll.u32 %v655, 16
        %v718 = vor.u32 %v715, %v716
        %v719 = vrot.slane %v715, 4
        %vm736 = vcmask 1043456
        %vm737 = vmand %vm736, %vm377
        %v738 = vld [vmem:[%s349] sm:$0xf]
        %v739 = vsel %vm737, %v662, %v738
        %740 = vst [vmem:[%s349] sm:$0xf] %v739
        %v741 = vld [vmem:[%s349 + $0x4] sm:$0x1]
        %v742 = vsel %vm352, %v663, %v741
        %743 = vst [vmem:[%s349 + $0x4] sm:$0x1] %v742
        %v744 = vld [vmem:[%s349 + $0x8] sm:$0xf]
        %v745 = vsel %vm737, %v670, %v744
        %746 = vst [vmem:[%s349 + $0x8] sm:$0xf] %v745
        %v747 = vld [vmem:[%s349 + $0xc] sm:$0x1]
        %v748 = vsel %vm352, %v671, %v747
        %749 = vst [vmem:[%s349 + $0xc] sm:$0x1] %v748
        %v750 = vld [vmem:[%s349 + $0x10] sm:$0xf]
        %v751 = vsel %vm737, %v678, %v750
        %752 = vst [vmem:[%s349 + $0x10] sm:$0xf] %v751
        %v753 = vld [vmem:[%s349 + $0x14] sm:$0x1]
        %v754 = vsel %vm352, %v679, %v753
        %755 = vst [vmem:[%s349 + $0x14] sm:$0x1] %v754
        %v756 = vld [vmem:[%s349 + $0x18] sm:$0xf]
        %v757 = vsel %vm737, %v686, %v756
        %758 = vst [vmem:[%s349 + $0x18] sm:$0xf] %v757
        %v759 = vld [vmem:[%s349 + $0x1c] sm:$0x1]
        %v760 = vsel %vm352, %v687, %v759
        %761 = vst [vmem:[%s349 + $0x1c] sm:$0x1] %v760
        %v762 = vld [vmem:[%s349 + $0x20] sm:$0xf]
        %v763 = vsel %vm737, %v694, %v762
        %764 = vst [vmem:[%s349 + $0x20] sm:$0xf] %v763
        %v765 = vld [vmem:[%s349 + $0x24] sm:$0x1]
        %v766 = vsel %vm352, %v695, %v765
        %767 = vst [vmem:[%s349 + $0x24] sm:$0x1] %v766
        %v768 = vld [vmem:[%s349 + $0x28] sm:$0xf]
        %v769 = vsel %vm737, %v702, %v768
        %770 = vst [vmem:[%s349 + $0x28] sm:$0xf] %v769
        %v771 = vld [vmem:[%s349 + $0x2c] sm:$0x1]
        %v772 = vsel %vm352, %v703, %v771
        %773 = vst [vmem:[%s349 + $0x2c] sm:$0x1] %v772
        %v774 = vld [vmem:[%s349 + $0x30] sm:$0xf]
        %v775 = vsel %vm737, %v710, %v774
        %776 = vst [vmem:[%s349 + $0x30] sm:$0xf] %v775
        %v777 = vld [vmem:[%s349 + $0x34] sm:$0x1]
        %v778 = vsel %vm352, %v711, %v777
        %779 = vst [vmem:[%s349 + $0x34] sm:$0x1] %v778
        %v780 = vld [vmem:[%s349 + $0x38] sm:$0xf]
        %v781 = vsel %vm737, %v718, %v780
        %782 = vst [vmem:[%s349 + $0x38] sm:$0xf] %v781
        %v783 = vld [vmem:[%s349 + $0x3c] sm:$0x1]
        %v784 = vsel %vm352, %v719, %v783
        %785 = vst [vmem:[%s349 + $0x3c] sm:$0x1] %v784
        %v786 = vld [vmem:[#allocation2] sm:$0xf]
        %v787 = vld [vmem:[#allocation2 + $0x8] sm:$0xf]
        %v788 = vld [vmem:[#allocation2 + $0x10] sm:$0xf]
        %v789 = vld [vmem:[#allocation2 + $0x18] sm:$0xf]
        %v790 = vld [vmem:[#allocation2 + $0x20] sm:$0xf]
        %v791 = vld [vmem:[#allocation2 + $0x28] sm:$0xf]
        %v792 = vld [vmem:[#allocation2 + $0x30] sm:$0xf]
        %v793 = vld [vmem:[#allocation2 + $0x38] sm:$0xf]
        %v794 = vld [vmem:[#allocation8] sm:$0xf]
        %v795 = vld [vmem:[#allocation8 + $0x4] sm:$0xf]
        %v796 = vld [vmem:[#allocation8 + $0x8] sm:$0xf]
        %v797 = vld [vmem:[#allocation8 + $0xc] sm:$0xf]
        %v798 = vld [vmem:[#allocation8 + $0x10] sm:$0xf]
        %v799 = vld [vmem:[#allocation8 + $0x14] sm:$0xf]
        %v800 = vld [vmem:[#allocation8 + $0x18] sm:$0xf]
        %v801 = vld [vmem:[#allocation8 + $0x1c] sm:$0xf]
        %v802 = vld [vmem:[#allocation8 + $0x20] sm:$0xf]
        %v803 = vld [vmem:[#allocation8 + $0x24] sm:$0xf]
        %v804 = vld [vmem:[#allocation8 + $0x28] sm:$0xf]
        %v805 = vld [vmem:[#allocation8 + $0x2c] sm:$0xf]
        %v806 = vld [vmem:[#allocation8 + $0x30] sm:$0xf]
        %v807 = vld [vmem:[#allocation8 + $0x34] sm:$0xf]
        %v808 = vld [vmem:[#allocation8 + $0x38] sm:$0xf]
        %v809 = vld [vmem:[#allocation8 + $0x3c] sm:$0xf]
        %v810 = vld [vmem:[#allocation2 + $0x4] sm:$0x1]
        %v811 = vld [vmem:[#allocation2 + $0xc] sm:$0x1]
        %v812 = vld [vmem:[#allocation2 + $0x14] sm:$0x1]
        %v813 = vld [vmem:[#allocation2 + $0x1c] sm:$0x1]
        %v814 = vld [vmem:[#allocation2 + $0x24] sm:$0x1]
        %v815 = vld [vmem:[#allocation2 + $0x2c] sm:$0x1]
        %v816 = vld [vmem:[#allocation2 + $0x34] sm:$0x1]
        %v817 = vld [vmem:[#allocation2 + $0x3c] sm:$0x1]
        %vm818 = vsmask.f32 3328
        %vm819 = vsmask.f32 7440
        %vm820 = vmor %vm818, %vm819
        %v822 = vshrl.u32 %v786, 16
        %v824 = vrot.slane %v822, 4
        %v825 = vshll.u32 %v786, 16
        %v827 = vrot.slane %v825, 5
        %v828 = vor.u32 %v824, %v827
        %v829 = vrot.slane %v828, 4
        %v831 = vshll.u32 %v810, 16
        %v833 = vrot.slane %v831, 5
        %v834 = vsel %vm820, %v829, %v833
        %v836 = vshrl.u32 %v787, 16
        %v838 = vrot.slane %v836, 4
        %v839 = vshll.u32 %v787, 16
        %v841 = vrot.slane %v839, 5
        %v842 = vor.u32 %v838, %v841
        %v843 = vrot.slane %v842, 4
        %v845 = vshll.u32 %v811, 16
        %v847 = vrot.slane %v845, 5
        %v848 = vsel %vm820, %v843, %v847
        %v850 = vshrl.u32 %v788, 16
        %v852 = vrot.slane %v850, 4
        %v853 = vshll.u32 %v788, 16
        %v855 = vrot.slane %v853, 5
        %v856 = vor.u32 %v852, %v855
        %v857 = vrot.slane %v856, 4
        %v859 = vshll.u32 %v812, 16
        %v861 = vrot.slane %v859, 5
        %v862 = vsel %vm820, %v857, %v861
        %v864 = vshrl.u32 %v789, 16
        %v866 = vrot.slane %v864, 4
        %v867 = vshll.u32 %v789, 16
        %v869 = vrot.slane %v867, 5
        %v870 = vor.u32 %v866, %v869
        %v871 = vrot.slane %v870, 4
        %v873 = vshll.u32 %v813, 16
        %v875 = vrot.slane %v873, 5
        %v876 = vsel %vm820, %v871, %v875
        %v878 = vshrl.u32 %v790, 16
        %v880 = vrot.slane %v878, 4
        %v881 = vshll.u32 %v790, 16
        %v883 = vrot.slane %v881, 5
        %v884 = vor.u32 %v880, %v883
        %v885 = vrot.slane %v884, 4
        %v887 = vshll.u32 %v814, 16
        %v889 = vrot.slane %v887, 5
        %v890 = vsel %vm820, %v885, %v889
        %v892 = vshrl.u32 %v791, 16
        %v894 = vrot.slane %v892, 4
        %v895 = vshll.u32 %v791, 16
        %v897 = vrot.slane %v895, 5
        %v898 = vor.u32 %v894, %v897
        %v899 = vrot.slane %v898, 4
        %v901 = vshll.u32 %v815, 16
        %v903 = vrot.slane %v901, 5
        %v904 = vsel %vm820, %v899, %v903
        %v906 = vshrl.u32 %v792, 16
        %v908 = vrot.slane %v906, 4
        %v909 = vshll.u32 %v792, 16
        %v911 = vrot.slane %v909, 5
        %v912 = vor.u32 %v908, %v911
        %v913 = vrot.slane %v912, 4
        %v915 = vshll.u32 %v816, 16
        %v917 = vrot.slane %v915, 5
        %v918 = vsel %vm820, %v913, %v917
        %v920 = vshrl.u32 %v793, 16
        %v922 = vrot.slane %v920, 4
        %v923 = vshll.u32 %v793, 16
        %v925 = vrot.slane %v923, 5
        %v926 = vor.u32 %v922, %v925
        %v927 = vrot.slane %v926, 4
        %v929 = vshll.u32 %v817, 16
        %v931 = vrot.slane %v929, 5
        %v932 = vsel %vm820, %v927, %v931
        %v933 = vld [vmem:[#allocation8 + $0x40] sm:$0xf]
        %v934 = vld [vmem:[#allocation8 + $0x44] sm:$0xf]
        %v935 = vld [vmem:[#allocation8 + $0x48] sm:$0xf]
        %v936 = vld [vmem:[#allocation8 + $0x4c] sm:$0xf]
        %v937 = vld [vmem:[#allocation8 + $0x50] sm:$0xf]
        %v938 = vld [vmem:[#allocation8 + $0x54] sm:$0xf]
        %v939 = vld [vmem:[#allocation8 + $0x58] sm:$0xf]
        %v940 = vld [vmem:[#allocation8 + $0x5c] sm:$0xf]
        %v941 = vld [vmem:[#allocation8 + $0x60] sm:$0xf]
        %v942 = vld [vmem:[#allocation8 + $0x64] sm:$0xf]
        %v943 = vld [vmem:[#allocation8 + $0x68] sm:$0xf]
        %v944 = vld [vmem:[#allocation8 + $0x6c] sm:$0xf]
        %v945 = vld [vmem:[#allocation8 + $0x70] sm:$0xf]
        %v946 = vld [vmem:[#allocation8 + $0x74] sm:$0xf]
        %v947 = vld [vmem:[#allocation8 + $0x78] sm:$0xf]
        %v948 = vld [vmem:[#allocation8 + $0x7c] sm:$0xf]
        %v949 = vunpack.c.l.b16 %v834
        %v950 = vunpack.c.l.b16 %v848
        %v951 = vunpack.c.l.b16 %v862
        %v952 = vunpack.c.l.b16 %v876
        %v953 = vunpack.c.l.b16 %v890
        %v954 = vunpack.c.l.b16 %v904
        %v955 = vunpack.c.l.b16 %v918
        %v956 = vunpack.c.l.b16 %v932
        %v957 = vpack.c.b16 %v950, %v949
        %v958 = vpack.c.b16 %v952, %v951
        %v959 = vpack.c.b16 %v954, %v953
        %v960 = vpack.c.b16 %v956, %v955
        %v981 = vunpack.c.l.b16 %v933
        %v982 = vunpack.c.l.b16 %v934
        %v983 = vunpack.c.l.b16 %v935
        %v984 = vunpack.c.l.b16 %v936
        %v985 = vunpack.c.l.b16 %v937
        %v986 = vunpack.c.l.b16 %v938
        %v987 = vunpack.c.l.b16 %v939
        %v988 = vunpack.c.l.b16 %v940
        %v989 = vunpack.c.l.b16 %v941
        %v990 = vunpack.c.l.b16 %v942
        %v991 = vunpack.c.l.b16 %v943
        %v992 = vunpack.c.l.b16 %v944
        %v993 = vunpack.c.l.b16 %v945
        %v994 = vunpack.c.l.b16 %v946
        %v995 = vunpack.c.l.b16 %v947
        %v996 = vunpack.c.l.b16 %v948
        %v997 = vpack.c.b16 %v982, %v981
        %v998 = vpack.c.b16 %v984, %v983
        %v999 = vpack.c.b16 %v986, %v985
        %v1000 = vpack.c.b16 %v988, %v987
        %v1001 = vpack.c.b16 %v990, %v989
        %v1002 = vpack.c.b16 %v992, %v991
        %v1003 = vpack.c.b16 %v994, %v993
        %v1004 = vpack.c.b16 %v996, %v995
        %1013 = vmatprep.subr.bf16.mxu0 0
        %1014 = vmatpush1.bf16.msra.mxu0 %v1004
        %1015 = vmatprep.subr.bf16.mxu0 0
        %1016 = vmatpush1.bf16.msra.mxu0 %v1003
        %1017 = vmatprep.subr.bf16.mxu0 0
        %1018 = vmatpush1.bf16.msra.mxu0 %v1002
        %1019 = vmatprep.subr.bf16.mxu0 0
        %1020 = vmatpush1.bf16.msra.mxu0 %v1001
        %1021 = vmatprep.subr.bf16.mxu0 0
        %1022 = vmatpush1.bf16.msra.mxu0 %v1000
        %1023 = vmatprep.subr.bf16.mxu0 0
        %1024 = vmatpush1.bf16.msra.mxu0 %v999
        %1025 = vmatprep.subr.bf16.mxu0 0
        %1026 = vmatpush1.bf16.msra.mxu0 %v998
        %1027 = vmatprep.subr.bf16.mxu0 0
        %1028 = vmatpush1.bf16.msra.mxu0 %v997
        %1029 = vmatprep.subr.bf16.mxu0 0
        %1030 = vmatpush2.bf16.msra.mxu0 0
        %1031 = vmatprep.subr.bf16.mxu0 0
        %1032 = vmatpush2.bf16.msra.mxu0 0
        %1033 = vmatprep.subr.bf16.mxu0 0
        %1034 = vmatpush2.bf16.msra.mxu0 0
        %1035 = vmatprep.subr.bf16.mxu0 0
        %1036 = vmatpush2.bf16.msra.mxu0 0
        %1037 = vmatprep.subr.bf16.mxu0 0
        %1038 = vmatpush2.bf16.msra.mxu0 0
        %1039 = vmatprep.subr.bf16.mxu0 0
        %1040 = vmatpush2.bf16.msra.mxu0 0
        %1041 = vmatprep.subr.bf16.mxu0 0
        %1042 = vmatpush2.bf16.msra.mxu0 0
        %1043 = vmatprep.subr.bf16.mxu0 0
        %1044 = vmatpush2.bf16.msra.mxu0 0
        %1045 = vmatprep.mubr.bf16.mxu0 0
        %1046 = vmatmul.mubr.bf16.gmra.mxu0 %v957
        %v1047 = vpop.f32.mrf.mxu0
        %v1048 = vadd.f32 0.0, %v1047
        %v1049 = vpop.f32.mrf.mxu0
        %v1050 = vpop.f32.mrf.mxu0
        %v1051 = vadd.f32 0.0, %v1050
        %v1052 = vpop.f32.mrf.mxu0
        %1053 = vmatprep.mubr.bf16.mxu0 0
        %1054 = vmatmul.mubr.bf16.gmra.mxu0 %v958
        %v1055 = vpop.f32.mrf.mxu0
        %v1056 = vadd.f32 0.0, %v1055
        %v1057 = vpop.f32.mrf.mxu0
        %v1058 = vpop.f32.mrf.mxu0
        %v1059 = vadd.f32 0.0, %v1058
        %v1060 = vpop.f32.mrf.mxu0
        %1061 = vmatprep.mubr.bf16.mxu0 0
        %1062 = vmatmul.mubr.bf16.gmra.mxu0 %v959
        %v1063 = vpop.f32.mrf.mxu0
        %v1064 = vadd.f32 0.0, %v1063
        %v1065 = vpop.f32.mrf.mxu0
        %v1066 = vpop.f32.mrf.mxu0
        %v1067 = vadd.f32 0.0, %v1066
        %v1068 = vpop.f32.mrf.mxu0
        %1069 = vmatprep.mubr.bf16.mxu0 0
        %1070 = vmatmul.mubr.bf16.gmra.mxu0 %v960
        %v1071 = vpop.f32.mrf.mxu0
        %v1072 = vadd.f32 0.0, %v1071
        %v1073 = vpop.f32.mrf.mxu0
        %v1074 = vpop.f32.mrf.mxu0
        %v1075 = vadd.f32 0.0, %v1074
        %v1076 = vpop.f32.mrf.mxu0
        %1077 = vdwg.mxu0
        %v1086 = vunpack.c.l.b16 %v786
        %v1087 = vunpack.c.l.b16 %v787
        %v1088 = vunpack.c.l.b16 %v788
        %v1089 = vunpack.c.l.b16 %v789
        %v1090 = vunpack.c.l.b16 %v790
        %v1091 = vunpack.c.l.b16 %v791
        %v1092 = vunpack.c.l.b16 %v792
        %v1093 = vunpack.c.l.b16 %v793
        %v1094 = vpack.c.b16 %v1087, %v1086
        %v1095 = vpack.c.b16 %v1089, %v1088
        %v1096 = vpack.c.b16 %v1091, %v1090
        %v1097 = vpack.c.b16 %v1093, %v1092
        %v1118 = vunpack.c.l.b16 %v794
        %v1119 = vunpack.c.l.b16 %v795
        %v1120 = vunpack.c.l.b16 %v796
        %v1121 = vunpack.c.l.b16 %v797
        %v1122 = vunpack.c.l.b16 %v798
        %v1123 = vunpack.c.l.b16 %v799
        %v1124 = vunpack.c.l.b16 %v800
        %v1125 = vunpack.c.l.b16 %v801
        %v1126 = vunpack.c.l.b16 %v802
        %v1127 = vunpack.c.l.b16 %v803
        %v1128 = vunpack.c.l.b16 %v804
        %v1129 = vunpack.c.l.b16 %v805
        %v1130 = vunpack.c.l.b16 %v806
        %v1131 = vunpack.c.l.b16 %v807
        %v1132 = vunpack.c.l.b16 %v808
        %v1133 = vunpack.c.l.b16 %v809
        %v1134 = vpack.c.b16 %v1119, %v1118
        %v1135 = vpack.c.b16 %v1121, %v1120
        %v1136 = vpack.c.b16 %v1123, %v1122
        %v1137 = vpack.c.b16 %v1125, %v1124
        %v1138 = vpack.c.b16 %v1127, %v1126
        %v1139 = vpack.c.b16 %v1129, %v1128
        %v1140 = vpack.c.b16 %v1131, %v1130
        %v1141 = vpack.c.b16 %v1133, %v1132
        %1150 = vmatprep.subr.bf16.mxu0 0
        %1151 = vmatpush1.bf16.msra.mxu0 %v1141
        %1152 = vmatprep.subr.bf16.mxu0 0
        %1153 = vmatpush1.bf16.msra.mxu0 %v1140
        %1154 = vmatprep.subr.bf16.mxu0 0
        %1155 = vmatpush1.bf16.msra.mxu0 %v1139
        %1156 = vmatprep.subr.bf16.mxu0 0
        %1157 = vmatpush1.bf16.msra.mxu0 %v1138
        %1158 = vmatprep.subr.bf16.mxu0 0
        %1159 = vmatpush1.bf16.msra.mxu0 %v1137
        %1160 = vmatprep.subr.bf16.mxu0 0
        %1161 = vmatpush1.bf16.msra.mxu0 %v1136
        %1162 = vmatprep.subr.bf16.mxu0 0
        %1163 = vmatpush1.bf16.msra.mxu0 %v1135
        %1164 = vmatprep.subr.bf16.mxu0 0
        %1165 = vmatpush1.bf16.msra.mxu0 %v1134
        %1166 = vmatprep.subr.bf16.mxu0 0
        %1167 = vmatpush2.bf16.msra.mxu0 0
        %1168 = vmatprep.subr.bf16.mxu0 0
        %1169 = vmatpush2.bf16.msra.mxu0 0
        %1170 = vmatprep.subr.bf16.mxu0 0
        %1171 = vmatpush2.bf16.msra.mxu0 0
        %1172 = vmatprep.subr.bf16.mxu0 0
        %1173 = vmatpush2.bf16.msra.mxu0 0
        %1174 = vmatprep.subr.bf16.mxu0 0
        %1175 = vmatpush2.bf16.msra.mxu0 0
        %1176 = vmatprep.subr.bf16.mxu0 0
        %1177 = vmatpush2.bf16.msra.mxu0 0
        %1178 = vmatprep.subr.bf16.mxu0 0
        %1179 = vmatpush2.bf16.msra.mxu0 0
        %1180 = vmatprep.subr.bf16.mxu0 0
        %1181 = vmatpush2.bf16.msra.mxu0 0
        %1182 = vmatprep.mubr.bf16.mxu0 0
        %1183 = vmatmul.mubr.bf16.gmra.mxu0 %v1094
        %v1184 = vpop.f32.mrf.mxu0
        %v1185 = vadd.f32 %v1048, %v1184
        %v1186 = vpop.f32.mrf.mxu0
        %v1187 = vpop.f32.mrf.mxu0
        %v1188 = vadd.f32 %v1051, %v1187
        %v1189 = vpop.f32.mrf.mxu0
        %1190 = vmatprep.mubr.bf16.mxu0 0
        %1191 = vmatmul.mubr.bf16.gmra.mxu0 %v1095
        %v1192 = vpop.f32.mrf.mxu0
        %v1193 = vadd.f32 %v1056, %v1192
        %v1194 = vpop.f32.mrf.mxu0
        %v1195 = vpop.f32.mrf.mxu0
        %v1196 = vadd.f32 %v1059, %v1195
        %v1197 = vpop.f32.mrf.mxu0
        %1198 = vmatprep.mubr.bf16.mxu0 0
        %1199 = vmatmul.mubr.bf16.gmra.mxu0 %v1096
        %v1200 = vpop.f32.mrf.mxu0
        %v1201 = vadd.f32 %v1064, %v1200
        %v1202 = vpop.f32.mrf.mxu0
        %v1203 = vpop.f32.mrf.mxu0
        %v1204 = vadd.f32 %v1067, %v1203
        %v1205 = vpop.f32.mrf.mxu0
        %1206 = vmatprep.mubr.bf16.mxu0 0
        %1207 = vmatmul.mubr.bf16.gmra.mxu0 %v1097
        %v1208 = vpop.f32.mrf.mxu0
        %v1209 = vadd.f32 %v1072, %v1208
        %v1210 = vpop.f32.mrf.mxu0
        %v1211 = vpop.f32.mrf.mxu0
        %v1212 = vadd.f32 %v1075, %v1211
        %v1213 = vpop.f32.mrf.mxu0
        %1214 = vdwg.mxu0
        %v1215 = vld [vmem:[#allocation2] sm:$0xe]
        %v1216 = vld [vmem:[#allocation2 + $0x8] sm:$0xe]
        %v1217 = vld [vmem:[#allocation2 + $0x10] sm:$0xe]
        %v1218 = vld [vmem:[#allocation2 + $0x18] sm:$0xe]
        %v1219 = vld [vmem:[#allocation2 + $0x20] sm:$0xe]
        %v1220 = vld [vmem:[#allocation2 + $0x28] sm:$0xe]
        %v1221 = vld [vmem:[#allocation2 + $0x30] sm:$0xe]
        %v1222 = vld [vmem:[#allocation2 + $0x38] sm:$0xe]
        %vm1239 = vcmask 1042432
        %vm1240 = vcmask 1046532
        %vm1241 = vmor %vm1239, %vm1240
        %v1242 = vrot.slane %v1215, 5
        %v1243 = vrot.slane %v1242, 4
        %v1244 = vrot.slane %v810, 5
        %v1245 = vsel %vm1241, %v1243, %v1244
        %v1246 = vrot.slane %v1216, 5
        %v1247 = vrot.slane %v1246, 4
        %v1248 = vrot.slane %v811, 5
        %v1249 = vsel %vm1241, %v1247, %v1248
        %v1250 = vrot.slane %v1217, 5
        %v1251 = vrot.slane %v1250, 4
        %v1252 = vrot.slane %v812, 5
        %v1253 = vsel %vm1241, %v1251, %v1252
        %v1254 = vrot.slane %v1218, 5
        %v1255 = vrot.slane %v1254, 4
        %v1256 = vrot.slane %v813, 5
        %v1257 = vsel %vm1241, %v1255, %v1256
        %v1258 = vrot.slane %v1219, 5
        %v1259 = vrot.slane %v1258, 4
        %v1260 = vrot.slane %v814, 5
        %v1261 = vsel %vm1241, %v1259, %v1260
        %v1262 = vrot.slane %v1220, 5
        %v1263 = vrot.slane %v1262, 4
        %v1264 = vrot.slane %v815, 5
        %v1265 = vsel %vm1241, %v1263, %v1264
        %v1266 = vrot.slane %v1221, 5
        %v1267 = vrot.slane %v1266, 4
        %v1268 = vrot.slane %v816, 5
        %v1269 = vsel %vm1241, %v1267, %v1268
        %v1270 = vrot.slane %v1222, 5
        %v1271 = vrot.slane %v1270, 4
        %v1272 = vrot.slane %v817, 5
        %v1273 = vsel %vm1241, %v1271, %v1272
        %v1274 = vld [vmem:[#allocation8 + $0x80] sm:$0xf]
        %v1275 = vld [vmem:[#allocation8 + $0x84] sm:$0xf]
        %v1276 = vld [vmem:[#allocation8 + $0x88] sm:$0xf]
        %v1277 = vld [vmem:[#allocation8 + $0x8c] sm:$0xf]
        %v1278 = vld [vmem:[#allocation8 + $0x90] sm:$0xf]
        %v1279 = vld [vmem:[#allocation8 + $0x94] sm:$0xf]
        %v1280 = vld [vmem:[#allocation8 + $0x98] sm:$0xf]
        %v1281 = vld [vmem:[#allocation8 + $0x9c] sm:$0xf]
        %v1282 = vld [vmem:[#allocation8 + $0xa0] sm:$0xf]
        %v1283 = vld [vmem:[#allocation8 + $0xa4] sm:$0xf]
        %v1284 = vld [vmem:[#allocation8 + $0xa8] sm:$0xf]
        %v1285 = vld [vmem:[#allocation8 + $0xac] sm:$0xf]
        %v1286 = vld [vmem:[#allocation8 + $0xb0] sm:$0xf]
        %v1287 = vld [vmem:[#allocation8 + $0xb4] sm:$0xf]
        %v1288 = vld [vmem:[#allocation8 + $0xb8] sm:$0xf]
        %v1289 = vld [vmem:[#allocation8 + $0xbc] sm:$0xf]
        %v1290 = vunpack.c.l.b16 %v1245
        %v1291 = vunpack.c.l.b16 %v1249
        %v1292 = vunpack.c.l.b16 %v1253
        %v1293 = vunpack.c.l.b16 %v1257
        %v1294 = vunpack.c.l.b16 %v1261
        %v1295 = vunpack.c.l.b16 %v1265
        %v1296 = vunpack.c.l.b16 %v1269
        %v1297 = vunpack.c.l.b16 %v1273
        %v1298 = vpack.c.b16 %v1291, %v1290
        %v1299 = vpack.c.b16 %v1293, %v1292
        %v1300 = vpack.c.b16 %v1295, %v1294
        %v1301 = vpack.c.b16 %v1297, %v1296
        %v1322 = vunpack.c.l.b16 %v1274
        %v1323 = vunpack.c.l.b16 %v1275
        %v1324 = vunpack.c.l.b16 %v1276
        %v1325 = vunpack.c.l.b16 %v1277
        %v1326 = vunpack.c.l.b16 %v1278
        %v1327 = vunpack.c.l.b16 %v1279
        %v1328 = vunpack.c.l.b16 %v1280
        %v1329 = vunpack.c.l.b16 %v1281
        %v1330 = vunpack.c.l.b16 %v1282
        %v1331 = vunpack.c.l.b16 %v1283
        %v1332 = vunpack.c.l.b16 %v1284
        %v1333 = vunpack.c.l.b16 %v1285
        %v1334 = vunpack.c.l.b16 %v1286
        %v1335 = vunpack.c.l.b16 %v1287
        %v1336 = vunpack.c.l.b16 %v1288
        %v1337 = vunpack.c.l.b16 %v1289
        %v1338 = vpack.c.b16 %v1323, %v1322
        %v1339 = vpack.c.b16 %v1325, %v1324
        %v1340 = vpack.c.b16 %v1327, %v1326
        %v1341 = vpack.c.b16 %v1329, %v1328
        %v1342 = vpack.c.b16 %v1331, %v1330
        %v1343 = vpack.c.b16 %v1333, %v1332
        %v1344 = vpack.c.b16 %v1335, %v1334
        %v1345 = vpack.c.b16 %v1337, %v1336
        %1354 = vmatprep.subr.bf16.mxu0 0
        %1355 = vmatpush1.bf16.msra.mxu0 %v1345
        %1356 = vmatprep.subr.bf16.mxu0 0
        %1357 = vmatpush1.bf16.msra.mxu0 %v1344
        %1358 = vmatprep.subr.bf16.mxu0 0
        %1359 = vmatpush1.bf16.msra.mxu0 %v1343
        %1360 = vmatprep.subr.bf16.mxu0 0
        %1361 = vmatpush1.bf16.msra.mxu0 %v1342
        %1362 = vmatprep.subr.bf16.mxu0 0
        %1363 = vmatpush1.bf16.msra.mxu0 %v1341
        %1364 = vmatprep.subr.bf16.mxu0 0
        %1365 = vmatpush1.bf16.msra.mxu0 %v1340
        %1366 = vmatprep.subr.bf16.mxu0 0
        %1367 = vmatpush1.bf16.msra.mxu0 %v1339
        %1368 = vmatprep.subr.bf16.mxu0 0
        %1369 = vmatpush1.bf16.msra.mxu0 %v1338
        %1370 = vmatprep.subr.bf16.mxu0 0
        %1371 = vmatpush2.bf16.msra.mxu0 0
        %1372 = vmatprep.subr.bf16.mxu0 0
        %1373 = vmatpush2.bf16.msra.mxu0 0
        %1374 = vmatprep.subr.bf16.mxu0 0
        %1375 = vmatpush2.bf16.msra.mxu0 0
        %1376 = vmatprep.subr.bf16.mxu0 0
        %1377 = vmatpush2.bf16.msra.mxu0 0
        %1378 = vmatprep.subr.bf16.mxu0 0
        %1379 = vmatpush2.bf16.msra.mxu0 0
        %1380 = vmatprep.subr.bf16.mxu0 0
        %1381 = vmatpush2.bf16.msra.mxu0 0
        %1382 = vmatprep.subr.bf16.mxu0 0
        %1383 = vmatpush2.bf16.msra.mxu0 0
        %1384 = vmatprep.subr.bf16.mxu0 0
        %1385 = vmatpush2.bf16.msra.mxu0 0
        %1386 = vmatprep.mubr.bf16.mxu0 0
        %1387 = vmatmul.mubr.bf16.gmra.mxu0 %v1298
        %v1388 = vpop.f32.mrf.mxu0
        %v1389 = vadd.f32 0.0, %v1388
        %v1390 = vpop.f32.mrf.mxu0
        %v1391 = vpop.f32.mrf.mxu0
        %v1392 = vadd.f32 0.0, %v1391
        %v1393 = vpop.f32.mrf.mxu0
        %1394 = vmatprep.mubr.bf16.mxu0 0
        %1395 = vmatmul.mubr.bf16.gmra.mxu0 %v1299
        %v1396 = vpop.f32.mrf.mxu0
        %v1397 = vadd.f32 0.0, %v1396
        %v1398 = vpop.f32.mrf.mxu0
        %v1399 = vpop.f32.mrf.mxu0
        %v1400 = vadd.f32 0.0, %v1399
        %v1401 = vpop.f32.mrf.mxu0
        %1402 = vmatprep.mubr.bf16.mxu0 0
        %1403 = vmatmul.mubr.bf16.gmra.mxu0 %v1300
        %v1404 = vpop.f32.mrf.mxu0
        %v1405 = vadd.f32 0.0, %v1404
        %v1406 = vpop.f32.mrf.mxu0
        %v1407 = vpop.f32.mrf.mxu0
        %v1408 = vadd.f32 0.0, %v1407
        %v1409 = vpop.f32.mrf.mxu0
        %1410 = vmatprep.mubr.bf16.mxu0 0
        %1411 = vmatmul.mubr.bf16.gmra.mxu0 %v1301
        %v1412 = vpop.f32.mrf.mxu0
        %v1413 = vadd.f32 0.0, %v1412
        %v1414 = vpop.f32.mrf.mxu0
        %v1415 = vpop.f32.mrf.mxu0
        %v1416 = vadd.f32 0.0, %v1415
        %v1417 = vpop.f32.mrf.mxu0
        %1418 = vdwg.mxu0
        %v1419 = vadd.f32 %v1185, %v1389
        %v1420 = vadd.f32 %v1188, %v1392
        %v1421 = vadd.f32 %v1193, %v1397
        %v1422 = vadd.f32 %v1196, %v1400
        %v1423 = vadd.f32 %v1201, %v1405
        %v1424 = vadd.f32 %v1204, %v1408
        %v1425 = vadd.f32 %v1209, %v1413
        %v1426 = vadd.f32 %v1212, %v1416
        %v1427 = vld [vmem:[%s349] sm:$0xf]
        %v1428 = vld [vmem:[%s349 + $0x8] sm:$0xf]
        %v1429 = vld [vmem:[%s349 + $0x10] sm:$0xf]
        %v1430 = vld [vmem:[%s349 + $0x18] sm:$0xf]
        %v1431 = vld [vmem:[%s349 + $0x20] sm:$0xf]
        %v1432 = vld [vmem:[%s349 + $0x28] sm:$0xf]
        %v1433 = vld [vmem:[%s349 + $0x30] sm:$0xf]
        %v1434 = vld [vmem:[%s349 + $0x38] sm:$0xf]
        %v1435 = vld [vmem:[#allocation8 + $0xc0] sm:$0xf]
        %v1436 = vld [vmem:[#allocation8 + $0xc4] sm:$0xf]
        %v1437 = vld [vmem:[#allocation8 + $0xc8] sm:$0xf]
        %v1438 = vld [vmem:[#allocation8 + $0xcc] sm:$0xf]
        %v1439 = vld [vmem:[#allocation8 + $0xd0] sm:$0xf]
        %v1440 = vld [vmem:[#allocation8 + $0xd4] sm:$0xf]
        %v1441 = vld [vmem:[#allocation8 + $0xd8] sm:$0xf]
        %v1442 = vld [vmem:[#allocation8 + $0xdc] sm:$0xf]
        %v1443 = vld [vmem:[#allocation8 + $0xe0] sm:$0xf]
        %v1444 = vld [vmem:[#allocation8 + $0xe4] sm:$0xf]
        %v1445 = vld [vmem:[#allocation8 + $0xe8] sm:$0xf]
        %v1446 = vld [vmem:[#allocation8 + $0xec] sm:$0xf]
        %v1447 = vld [vmem:[#allocation8 + $0xf0] sm:$0xf]
        %v1448 = vld [vmem:[#allocation8 + $0xf4] sm:$0xf]
        %v1449 = vld [vmem:[#allocation8 + $0xf8] sm:$0xf]
        %v1450 = vld [vmem:[#allocation8 + $0xfc] sm:$0xf]
        %v1459 = vunpack.c.l.b16 %v1427
        %v1460 = vunpack.c.l.b16 %v1428
        %v1461 = vunpack.c.l.b16 %v1429
        %v1462 = vunpack.c.l.b16 %v1430
        %v1463 = vunpack.c.l.b16 %v1431
        %v1464 = vunpack.c.l.b16 %v1432
        %v1465 = vunpack.c.l.b16 %v1433
        %v1466 = vunpack.c.l.b16 %v1434
        %v1467 = vpack.c.b16 %v1460, %v1459
        %v1468 = vpack.c.b16 %v1462, %v1461
        %v1469 = vpack.c.b16 %v1464, %v1463
        %v1470 = vpack.c.b16 %v1466, %v1465
        %v1491 = vunpack.c.l.b16 %v1435
        %v1492 = vunpack.c.l.b16 %v1436
        %v1493 = vunpack.c.l.b16 %v1437
        %v1494 = vunpack.c.l.b16 %v1438
        %v1495 = vunpack.c.l.b16 %v1439
        %v1496 = vunpack.c.l.b16 %v1440
        %v1497 = vunpack.c.l.b16 %v1441
        %v1498 = vunpack.c.l.b16 %v1442
        %v1499 = vunpack.c.l.b16 %v1443
        %v1500 = vunpack.c.l.b16 %v1444
        %v1501 = vunpack.c.l.b16 %v1445
        %v1502 = vunpack.c.l.b16 %v1446
        %v1503 = vunpack.c.l.b16 %v1447
        %v1504 = vunpack.c.l.b16 %v1448
        %v1505 = vunpack.c.l.b16 %v1449
        %v1506 = vunpack.c.l.b16 %v1450
        %v1507 = vpack.c.b16 %v1492, %v1491
        %v1508 = vpack.c.b16 %v1494, %v1493
        %v1509 = vpack.c.b16 %v1496, %v1495
        %v1510 = vpack.c.b16 %v1498, %v1497
        %v1511 = vpack.c.b16 %v1500, %v1499
        %v1512 = vpack.c.b16 %v1502, %v1501
        %v1513 = vpack.c.b16 %v1504, %v1503
        %v1514 = vpack.c.b16 %v1506, %v1505
        %1523 = vmatprep.subr.bf16.mxu0 0
        %1524 = vmatpush1.bf16.msra.mxu0 %v1514
        %1525 = vmatprep.subr.bf16.mxu0 0
        %1526 = vmatpush1.bf16.msra.mxu0 %v1513
        %1527 = vmatprep.subr.bf16.mxu0 0
        %1528 = vmatpush1.bf16.msra.mxu0 %v1512
        %1529 = vmatprep.subr.bf16.mxu0 0
        %1530 = vmatpush1.bf16.msra.mxu0 %v1511
        %1531 = vmatprep.subr.bf16.mxu0 0
        %1532 = vmatpush1.bf16.msra.mxu0 %v1510
        %1533 = vmatprep.subr.bf16.mxu0 0
        %1534 = vmatpush1.bf16.msra.mxu0 %v1509
        %1535 = vmatprep.subr.bf16.mxu0 0
        %1536 = vmatpush1.bf16.msra.mxu0 %v1508
        %1537 = vmatprep.subr.bf16.mxu0 0
        %1538 = vmatpush1.bf16.msra.mxu0 %v1507
        %1539 = vmatprep.subr.bf16.mxu0 0
        %1540 = vmatpush2.bf16.msra.mxu0 0
        %1541 = vmatprep.subr.bf16.mxu0 0
        %1542 = vmatpush2.bf16.msra.mxu0 0
        %1543 = vmatprep.subr.bf16.mxu0 0
        %1544 = vmatpush2.bf16.msra.mxu0 0
        %1545 = vmatprep.subr.bf16.mxu0 0
        %1546 = vmatpush2.bf16.msra.mxu0 0
        %1547 = vmatprep.subr.bf16.mxu0 0
        %1548 = vmatpush2.bf16.msra.mxu0 0
        %1549 = vmatprep.subr.bf16.mxu0 0
        %1550 = vmatpush2.bf16.msra.mxu0 0
        %1551 = vmatprep.subr.bf16.mxu0 0
        %1552 = vmatpush2.bf16.msra.mxu0 0
        %1553 = vmatprep.subr.bf16.mxu0 0
        %1554 = vmatpush2.bf16.msra.mxu0 0
        %1555 = vmatprep.mubr.bf16.mxu0 0
        %1556 = vmatmul.mubr.bf16.gmra.mxu0 %v1467
        %v1557 = vpop.f32.mrf.mxu0
        %v1558 = vadd.f32 0.0, %v1557
        %v1559 = vpop.f32.mrf.mxu0
        %v1560 = vpop.f32.mrf.mxu0
        %v1561 = vadd.f32 0.0, %v1560
        %v1562 = vpop.f32.mrf.mxu0
        %1563 = vmatprep.mubr.bf16.mxu0 0
        %1564 = vmatmul.mubr.bf16.gmra.mxu0 %v1468
        %v1565 = vpop.f32.mrf.mxu0
        %v1566 = vadd.f32 0.0, %v1565
        %v1567 = vpop.f32.mrf.mxu0
        %v1568 = vpop.f32.mrf.mxu0
        %v1569 = vadd.f32 0.0, %v1568
        %v1570 = vpop.f32.mrf.mxu0
        %1571 = vmatprep.mubr.bf16.mxu0 0
        %1572 = vmatmul.mubr.bf16.gmra.mxu0 %v1469
        %v1573 = vpop.f32.mrf.mxu0
        %v1574 = vadd.f32 0.0, %v1573
        %v1575 = vpop.f32.mrf.mxu0
        %v1576 = vpop.f32.mrf.mxu0
        %v1577 = vadd.f32 0.0, %v1576
        %v1578 = vpop.f32.mrf.mxu0
        %1579 = vmatprep.mubr.bf16.mxu0 0
        %1580 = vmatmul.mubr.bf16.gmra.mxu0 %v1470
        %v1581 = vpop.f32.mrf.mxu0
        %v1582 = vadd.f32 0.0, %v1581
        %v1583 = vpop.f32.mrf.mxu0
        %v1584 = vpop.f32.mrf.mxu0
        %v1585 = vadd.f32 0.0, %v1584
        %v1586 = vpop.f32.mrf.mxu0
        %1587 = vdwg.mxu0
        %v1588 = vadd.f32 %v1419, %v1558
        %v1589 = vadd.f32 %v1420, %v1561
        %v1590 = vadd.f32 %v1421, %v1566
        %v1591 = vadd.f32 %v1422, %v1569
        %v1592 = vadd.f32 %v1423, %v1574
        %v1593 = vadd.f32 %v1424, %v1577
        %v1594 = vadd.f32 %v1425, %v1582
        %v1595 = vadd.f32 %v1426, %v1585
        %v1596 = vld [vmem:[%s349] sm:$0xf]
        %v1597 = vld [vmem:[%s349 + $0x4] sm:$0x1]
        %v1598 = vld [vmem:[%s349 + $0x8] sm:$0xf]
        %v1599 = vld [vmem:[%s349 + $0xc] sm:$0x1]
        %v1600 = vld [vmem:[%s349 + $0x10] sm:$0xf]
        %v1601 = vld [vmem:[%s349 + $0x14] sm:$0x1]
        %v1602 = vld [vmem:[%s349 + $0x18] sm:$0xf]
        %v1603 = vld [vmem:[%s349 + $0x1c] sm:$0x1]
        %v1604 = vld [vmem:[%s349 + $0x20] sm:$0xf]
        %v1605 = vld [vmem:[%s349 + $0x24] sm:$0x1]
        %v1606 = vld [vmem:[%s349 + $0x28] sm:$0xf]
        %v1607 = vld [vmem:[%s349 + $0x2c] sm:$0x1]
        %v1608 = vld [vmem:[%s349 + $0x30] sm:$0xf]
        %v1609 = vld [vmem:[%s349 + $0x34] sm:$0x1]
        %v1610 = vld [vmem:[%s349 + $0x38] sm:$0xf]
        %v1611 = vld [vmem:[%s349 + $0x3c] sm:$0x1]
        %v1613 = vshrl.u32 %v1596, 16
        %v1615 = vrot.slane %v1613, 4
        %v1616 = vshll.u32 %v1596, 16
        %v1618 = vrot.slane %v1616, 5
        %v1619 = vor.u32 %v1615, %v1618
        %v1620 = vrot.slane %v1619, 4
        %v1622 = vshll.u32 %v1597, 16
        %v1624 = vrot.slane %v1622, 5
        %v1625 = vsel %vm820, %v1620, %v1624
        %v1627 = vshrl.u32 %v1598, 16
        %v1629 = vrot.slane %v1627, 4
        %v1630 = vshll.u32 %v1598, 16
        %v1632 = vrot.slane %v1630, 5
        %v1633 = vor.u32 %v1629, %v1632
        %v1634 = vrot.slane %v1633, 4
        %v1636 = vshll.u32 %v1599, 16
        %v1638 = vrot.slane %v1636, 5
        %v1639 = vsel %vm820, %v1634, %v1638
        %v1641 = vshrl.u32 %v1600, 16
        %v1643 = vrot.slane %v1641, 4
        %v1644 = vshll.u32 %v1600, 16
        %v1646 = vrot.slane %v1644, 5
        %v1647 = vor.u32 %v1643, %v1646
        %v1648 = vrot.slane %v1647, 4
        %v1650 = vshll.u32 %v1601, 16
        %v1652 = vrot.slane %v1650, 5
        %v1653 = vsel %vm820, %v1648, %v1652
        %v1655 = vshrl.u32 %v1602, 16
        %v1657 = vrot.slane %v1655, 4
        %v1658 = vshll.u32 %v1602, 16
        %v1660 = vrot.slane %v1658, 5
        %v1661 = vor.u32 %v1657, %v1660
        %v1662 = vrot.slane %v1661, 4
        %v1664 = vshll.u32 %v1603, 16
        %v1666 = vrot.slane %v1664, 5
        %v1667 = vsel %vm820, %v1662, %v1666
        %v1669 = vshrl.u32 %v1604, 16
        %v1671 = vrot.slane %v1669, 4
        %v1672 = vshll.u32 %v1604, 16
        %v1674 = vrot.slane %v1672, 5
        %v1675 = vor.u32 %v1671, %v1674
        %v1676 = vrot.slane %v1675, 4
        %v1678 = vshll.u32 %v1605, 16
        %v1680 = vrot.slane %v1678, 5
        %v1681 = vsel %vm820, %v1676, %v1680
        %v1683 = vshrl.u32 %v1606, 16
        %v1685 = vrot.slane %v1683, 4
        %v1686 = vshll.u32 %v1606, 16
        %v1688 = vrot.slane %v1686, 5
        %v1689 = vor.u32 %v1685, %v1688
        %v1690 = vrot.slane %v1689, 4
        %v1692 = vshll.u32 %v1607, 16
        %v1694 = vrot.slane %v1692, 5
        %v1695 = vsel %vm820, %v1690, %v1694
        %v1697 = vshrl.u32 %v1608, 16
        %v1699 = vrot.slane %v1697, 4
        %v1700 = vshll.u32 %v1608, 16
        %v1702 = vrot.slane %v1700, 5
        %v1703 = vor.u32 %v1699, %v1702
        %v1704 = vrot.slane %v1703, 4
        %v1706 = vshll.u32 %v1609, 16
        %v1708 = vrot.slane %v1706, 5
        %v1709 = vsel %vm820, %v1704, %v1708
        %v1711 = vshrl.u32 %v1610, 16
        %v1713 = vrot.slane %v1711, 4
        %v1714 = vshll.u32 %v1610, 16
        %v1716 = vrot.slane %v1714, 5
        %v1717 = vor.u32 %v1713, %v1716
        %v1718 = vrot.slane %v1717, 4
        %v1720 = vshll.u32 %v1611, 16
        %v1722 = vrot.slane %v1720, 5
        %v1723 = vsel %vm820, %v1718, %v1722
        %v1724 = vld [vmem:[#allocation8 + $0x100] sm:$0xf]
        %v1725 = vld [vmem:[#allocation8 + $0x104] sm:$0xf]
        %v1726 = vld [vmem:[#allocation8 + $0x108] sm:$0xf]
        %v1727 = vld [vmem:[#allocation8 + $0x10c] sm:$0xf]
        %v1728 = vld [vmem:[#allocation8 + $0x110] sm:$0xf]
        %v1729 = vld [vmem:[#allocation8 + $0x114] sm:$0xf]
        %v1730 = vld [vmem:[#allocation8 + $0x118] sm:$0xf]
        %v1731 = vld [vmem:[#allocation8 + $0x11c] sm:$0xf]
        %v1732 = vld [vmem:[#allocation8 + $0x120] sm:$0xf]
        %v1733 = vld [vmem:[#allocation8 + $0x124] sm:$0xf]
        %v1734 = vld [vmem:[#allocation8 + $0x128] sm:$0xf]
        %v1735 = vld [vmem:[#allocation8 + $0x12c] sm:$0xf]
        %v1736 = vld [vmem:[#allocation8 + $0x130] sm:$0xf]
        %v1737 = vld [vmem:[#allocation8 + $0x134] sm:$0xf]
        %v1738 = vld [vmem:[#allocation8 + $0x138] sm:$0xf]
        %v1739 = vld [vmem:[#allocation8 + $0x13c] sm:$0xf]
        %v1740 = vunpack.c.l.b16 %v1625
        %v1741 = vunpack.c.l.b16 %v1639
        %v1742 = vunpack.c.l.b16 %v1653
        %v1743 = vunpack.c.l.b16 %v1667
        %v1744 = vunpack.c.l.b16 %v1681
        %v1745 = vunpack.c.l.b16 %v1695
        %v1746 = vunpack.c.l.b16 %v1709
        %v1747 = vunpack.c.l.b16 %v1723
        %v1748 = vpack.c.b16 %v1741, %v1740
        %v1749 = vpack.c.b16 %v1743, %v1742
        %v1750 = vpack.c.b16 %v1745, %v1744
        %v1751 = vpack.c.b16 %v1747, %v1746
        %v1772 = vunpack.c.l.b16 %v1724
        %v1773 = vunpack.c.l.b16 %v1725
        %v1774 = vunpack.c.l.b16 %v1726
        %v1775 = vunpack.c.l.b16 %v1727
        %v1776 = vunpack.c.l.b16 %v1728
        %v1777 = vunpack.c.l.b16 %v1729
        %v1778 = vunpack.c.l.b16 %v1730
        %v1779 = vunpack.c.l.b16 %v1731
        %v1780 = vunpack.c.l.b16 %v1732
        %v1781 = vunpack.c.l.b16 %v1733
        %v1782 = vunpack.c.l.b16 %v1734
        %v1783 = vunpack.c.l.b16 %v1735
        %v1784 = vunpack.c.l.b16 %v1736
        %v1785 = vunpack.c.l.b16 %v1737
        %v1786 = vunpack.c.l.b16 %v1738
        %v1787 = vunpack.c.l.b16 %v1739
        %v1788 = vpack.c.b16 %v1773, %v1772
        %v1789 = vpack.c.b16 %v1775, %v1774
        %v1790 = vpack.c.b16 %v1777, %v1776
        %v1791 = vpack.c.b16 %v1779, %v1778
        %v1792 = vpack.c.b16 %v1781, %v1780
        %v1793 = vpack.c.b16 %v1783, %v1782
        %v1794 = vpack.c.b16 %v1785, %v1784
        %v1795 = vpack.c.b16 %v1787, %v1786
        %1804 = vmatprep.subr.bf16.mxu0 0
        %1805 = vmatpush1.bf16.msra.mxu0 %v1795
        %1806 = vmatprep.subr.bf16.mxu0 0
        %1807 = vmatpush1.bf16.msra.mxu0 %v1794
        %1808 = vmatprep.subr.bf16.mxu0 0
        %1809 = vmatpush1.bf16.msra.mxu0 %v1793
        %1810 = vmatprep.subr.bf16.mxu0 0
        %1811 = vmatpush1.bf16.msra.mxu0 %v1792
        %1812 = vmatprep.subr.bf16.mxu0 0
        %1813 = vmatpush1.bf16.msra.mxu0 %v1791
        %1814 = vmatprep.subr.bf16.mxu0 0
        %1815 = vmatpush1.bf16.msra.mxu0 %v1790
        %1816 = vmatprep.subr.bf16.mxu0 0
        %1817 = vmatpush1.bf16.msra.mxu0 %v1789
        %1818 = vmatprep.subr.bf16.mxu0 0
        %1819 = vmatpush1.bf16.msra.mxu0 %v1788
        %1820 = vmatprep.subr.bf16.mxu0 0
        %1821 = vmatpush2.bf16.msra.mxu0 0
        %1822 = vmatprep.subr.bf16.mxu0 0
        %1823 = vmatpush2.bf16.msra.mxu0 0
        %1824 = vmatprep.subr.bf16.mxu0 0
        %1825 = vmatpush2.bf16.msra.mxu0 0
        %1826 = vmatprep.subr.bf16.mxu0 0
        %1827 = vmatpush2.bf16.msra.mxu0 0
        %1828 = vmatprep.subr.bf16.mxu0 0
        %1829 = vmatpush2.bf16.msra.mxu0 0
        %1830 = vmatprep.subr.bf16.mxu0 0
        %1831 = vmatpush2.bf16.msra.mxu0 0
        %1832 = vmatprep.subr.bf16.mxu0 0
        %1833 = vmatpush2.bf16.msra.mxu0 0
        %1834 = vmatprep.subr.bf16.mxu0 0
        %1835 = vmatpush2.bf16.msra.mxu0 0
        %1836 = vmatprep.mubr.bf16.mxu0 0
        %1837 = vmatmul.mubr.bf16.gmra.mxu0 %v1748
        %v1838 = vpop.f32.mrf.mxu0
        %v1839 = vadd.f32 0.0, %v1838
        %v1840 = vpop.f32.mrf.mxu0
        %v1841 = vpop.f32.mrf.mxu0
        %v1842 = vadd.f32 0.0, %v1841
        %v1843 = vpop.f32.mrf.mxu0
        %1844 = vmatprep.mubr.bf16.mxu0 0
        %1845 = vmatmul.mubr.bf16.gmra.mxu0 %v1749
        %v1846 = vpop.f32.mrf.mxu0
        %v1847 = vadd.f32 0.0, %v1846
        %v1848 = vpop.f32.mrf.mxu0
        %v1849 = vpop.f32.mrf.mxu0
        %v1850 = vadd.f32 0.0, %v1849
        %v1851 = vpop.f32.mrf.mxu0
        %1852 = vmatprep.mubr.bf16.mxu0 0
        %1853 = vmatmul.mubr.bf16.gmra.mxu0 %v1750
        %v1854 = vpop.f32.mrf.mxu0
        %v1855 = vadd.f32 0.0, %v1854
        %v1856 = vpop.f32.mrf.mxu0
        %v1857 = vpop.f32.mrf.mxu0
        %v1858 = vadd.f32 0.0, %v1857
        %v1859 = vpop.f32.mrf.mxu0
        %1860 = vmatprep.mubr.bf16.mxu0 0
        %1861 = vmatmul.mubr.bf16.gmra.mxu0 %v1751
        %v1862 = vpop.f32.mrf.mxu0
        %v1863 = vadd.f32 0.0, %v1862
        %v1864 = vpop.f32.mrf.mxu0
        %v1865 = vpop.f32.mrf.mxu0
        %v1866 = vadd.f32 0.0, %v1865
        %v1867 = vpop.f32.mrf.mxu0
        %1868 = vdwg.mxu0
        %v1869 = vadd.f32 %v1588, %v1839
        %v1870 = vadd.f32 %v1589, %v1842
        %v1871 = vadd.f32 %v1590, %v1847
        %v1872 = vadd.f32 %v1591, %v1850
        %v1873 = vadd.f32 %v1592, %v1855
        %v1874 = vadd.f32 %v1593, %v1858
        %v1875 = vadd.f32 %v1594, %v1863
        %v1876 = vadd.f32 %v1595, %v1866
        %v1877 = vld [vmem:[%s349] sm:$0xe]
        %v1878 = vld [vmem:[%s349 + $0x8] sm:$0xe]
        %v1879 = vld [vmem:[%s349 + $0x10] sm:$0xe]
        %v1880 = vld [vmem:[%s349 + $0x18] sm:$0xe]
        %v1881 = vld [vmem:[%s349 + $0x20] sm:$0xe]
        %v1882 = vld [vmem:[%s349 + $0x28] sm:$0xe]
        %v1883 = vld [vmem:[%s349 + $0x30] sm:$0xe]
        %v1884 = vld [vmem:[%s349 + $0x38] sm:$0xe]
        %v1901 = vrot.slane %v1877, 5
        %v1902 = vrot.slane %v1901, 4
        %v1903 = vrot.slane %v1597, 5
        %v1904 = vsel %vm1241, %v1902, %v1903
        %v1905 = vrot.slane %v1878, 5
        %v1906 = vrot.slane %v1905, 4
        %v1907 = vrot.slane %v1599, 5
        %v1908 = vsel %vm1241, %v1906, %v1907
        %v1909 = vrot.slane %v1879, 5
        %v1910 = vrot.slane %v1909, 4
        %v1911 = vrot.slane %v1601, 5
        %v1912 = vsel %vm1241, %v1910, %v1911
        %v1913 = vrot.slane %v1880, 5
        %v1914 = vrot.slane %v1913, 4
        %v1915 = vrot.slane %v1603, 5
        %v1916 = vsel %vm1241, %v1914, %v1915
        %v1917 = vrot.slane %v1881, 5
        %v1918 = vrot.slane %v1917, 4
        %v1919 = vrot.slane %v1605, 5
        %v1920 = vsel %vm1241, %v1918, %v1919
        %v1921 = vrot.slane %v1882, 5
        %v1922 = vrot.slane %v1921, 4
        %v1923 = vrot.slane %v1607, 5
        %v1924 = vsel %vm1241, %v1922, %v1923
        %v1925 = vrot.slane %v1883, 5
        %v1926 = vrot.slane %v1925, 4
        %v1927 = vrot.slane %v1609, 5
        %v1928 = vsel %vm1241, %v1926, %v1927
        %v1929 = vrot.slane %v1884, 5
        %v1930 = vrot.slane %v1929, 4
        %v1931 = vrot.slane %v1611, 5
        %v1932 = vsel %vm1241, %v1930, %v1931
        %v1933 = vld [vmem:[#allocation8 + $0x140] sm:$0xf]
        %v1934 = vld [vmem:[#allocation8 + $0x144] sm:$0xf]
        %v1935 = vld [vmem:[#allocation8 + $0x148] sm:$0xf]
        %v1936 = vld [vmem:[#allocation8 + $0x14c] sm:$0xf]
        %v1937 = vld [vmem:[#allocation8 + $0x150] sm:$0xf]
        %v1938 = vld [vmem:[#allocation8 + $0x154] sm:$0xf]
        %v1939 = vld [vmem:[#allocation8 + $0x158] sm:$0xf]
        %v1940 = vld [vmem:[#allocation8 + $0x15c] sm:$0xf]
        %v1941 = vld [vmem:[#allocation8 + $0x160] sm:$0xf]
        %v1942 = vld [vmem:[#allocation8 + $0x164] sm:$0xf]
        %v1943 = vld [vmem:[#allocation8 + $0x168] sm:$0xf]
        %v1944 = vld [vmem:[#allocation8 + $0x16c] sm:$0xf]
        %v1945 = vld [vmem:[#allocation8 + $0x170] sm:$0xf]
        %v1946 = vld [vmem:[#allocation8 + $0x174] sm:$0xf]
        %v1947 = vld [vmem:[#allocation8 + $0x178] sm:$0xf]
        %v1948 = vld [vmem:[#allocation8 + $0x17c] sm:$0xf]
        %v1949 = vunpack.c.l.b16 %v1904
        %v1950 = vunpack.c.l.b16 %v1908
        %v1951 = vunpack.c.l.b16 %v1912
        %v1952 = vunpack.c.l.b16 %v1916
        %v1953 = vunpack.c.l.b16 %v1920
        %v1954 = vunpack.c.l.b16 %v1924
        %v1955 = vunpack.c.l.b16 %v1928
        %v1956 = vunpack.c.l.b16 %v1932
        %v1957 = vpack.c.b16 %v1950, %v1949
        %v1958 = vpack.c.b16 %v1952, %v1951
        %v1959 = vpack.c.b16 %v1954, %v1953
        %v1960 = vpack.c.b16 %v1956, %v1955
        %v1981 = vunpack.c.l.b16 %v1933
        %v1982 = vunpack.c.l.b16 %v1934
        %v1983 = vunpack.c.l.b16 %v1935
        %v1984 = vunpack.c.l.b16 %v1936
        %v1985 = vunpack.c.l.b16 %v1937
        %v1986 = vunpack.c.l.b16 %v1938
        %v1987 = vunpack.c.l.b16 %v1939
        %v1988 = vunpack.c.l.b16 %v1940
        %v1989 = vunpack.c.l.b16 %v1941
        %v1990 = vunpack.c.l.b16 %v1942
        %v1991 = vunpack.c.l.b16 %v1943
        %v1992 = vunpack.c.l.b16 %v1944
        %v1993 = vunpack.c.l.b16 %v1945
        %v1994 = vunpack.c.l.b16 %v1946
        %v1995 = vunpack.c.l.b16 %v1947
        %v1996 = vunpack.c.l.b16 %v1948
        %v1997 = vpack.c.b16 %v1982, %v1981
        %v1998 = vpack.c.b16 %v1984, %v1983
        %v1999 = vpack.c.b16 %v1986, %v1985
        %v2000 = vpack.c.b16 %v1988, %v1987
        %v2001 = vpack.c.b16 %v1990, %v1989
        %v2002 = vpack.c.b16 %v1992, %v1991
        %v2003 = vpack.c.b16 %v1994, %v1993
        %v2004 = vpack.c.b16 %v1996, %v1995
        %2013 = vmatprep.subr.bf16.mxu0 0
        %2014 = vmatpush1.bf16.msra.mxu0 %v2004
        %2015 = vmatprep.subr.bf16.mxu0 0
        %2016 = vmatpush1.bf16.msra.mxu0 %v2003
        %2017 = vmatprep.subr.bf16.mxu0 0
        %2018 = vmatpush1.bf16.msra.mxu0 %v2002
        %2019 = vmatprep.subr.bf16.mxu0 0
        %2020 = vmatpush1.bf16.msra.mxu0 %v2001
        %2021 = vmatprep.subr.bf16.mxu0 0
        %2022 = vmatpush1.bf16.msra.mxu0 %v2000
        %2023 = vmatprep.subr.bf16.mxu0 0
        %2024 = vmatpush1.bf16.msra.mxu0 %v1999
        %2025 = vmatprep.subr.bf16.mxu0 0
        %2026 = vmatpush1.bf16.msra.mxu0 %v1998
        %2027 = vmatprep.subr.bf16.mxu0 0
        %2028 = vmatpush1.bf16.msra.mxu0 %v1997
        %2029 = vmatprep.subr.bf16.mxu0 0
        %2030 = vmatpush2.bf16.msra.mxu0 0
        %2031 = vmatprep.subr.bf16.mxu0 0
        %2032 = vmatpush2.bf16.msra.mxu0 0
        %2033 = vmatprep.subr.bf16.mxu0 0
        %2034 = vmatpush2.bf16.msra.mxu0 0
        %2035 = vmatprep.subr.bf16.mxu0 0
        %2036 = vmatpush2.bf16.msra.mxu0 0
        %2037 = vmatprep.subr.bf16.mxu0 0
        %2038 = vmatpush2.bf16.msra.mxu0 0
        %2039 = vmatprep.subr.bf16.mxu0 0
        %2040 = vmatpush2.bf16.msra.mxu0 0
        %2041 = vmatprep.subr.bf16.mxu0 0
        %2042 = vmatpush2.bf16.msra.mxu0 0
        %2043 = vmatprep.subr.bf16.mxu0 0
        %2044 = vmatpush2.bf16.msra.mxu0 0
        %2045 = vmatprep.mubr.bf16.mxu0 0
        %2046 = vmatmul.mubr.bf16.gmra.mxu0 %v1957
        %v2047 = vpop.f32.mrf.mxu0
        %v2048 = vadd.f32 0.0, %v2047
        %v2049 = vpop.f32.mrf.mxu0
        %v2050 = vpop.f32.mrf.mxu0
        %v2051 = vadd.f32 0.0, %v2050
        %v2052 = vpop.f32.mrf.mxu0
        %2053 = vmatprep.mubr.bf16.mxu0 0
        %2054 = vmatmul.mubr.bf16.gmra.mxu0 %v1958
        %v2055 = vpop.f32.mrf.mxu0
        %v2056 = vadd.f32 0.0, %v2055
        %v2057 = vpop.f32.mrf.mxu0
        %v2058 = vpop.f32.mrf.mxu0
        %v2059 = vadd.f32 0.0, %v2058
        %v2060 = vpop.f32.mrf.mxu0
        %2061 = vmatprep.mubr.bf16.mxu0 0
        %2062 = vmatmul.mubr.bf16.gmra.mxu0 %v1959
        %v2063 = vpop.f32.mrf.mxu0
        %v2064 = vadd.f32 0.0, %v2063
        %v2065 = vpop.f32.mrf.mxu0
        %v2066 = vpop.f32.mrf.mxu0
        %v2067 = vadd.f32 0.0, %v2066
        %v2068 = vpop.f32.mrf.mxu0
        %2069 = vmatprep.mubr.bf16.mxu0 0
        %2070 = vmatmul.mubr.bf16.gmra.mxu0 %v1960
        %v2071 = vpop.f32.mrf.mxu0
        %v2072 = vadd.f32 0.0, %v2071
        %v2073 = vpop.f32.mrf.mxu0
        %v2074 = vpop.f32.mrf.mxu0
        %v2075 = vadd.f32 0.0, %v2074
        %v2076 = vpop.f32.mrf.mxu0
        %2077 = vdwg.mxu0
        %v2078 = vadd.f32 %v1869, %v2048
        %v2079 = vadd.f32 %v1870, %v2051
        %v2080 = vadd.f32 %v1871, %v2056
        %v2081 = vadd.f32 %v1872, %v2059
        %v2082 = vadd.f32 %v1873, %v2064
        %v2083 = vadd.f32 %v1874, %v2067
        %v2084 = vadd.f32 %v1875, %v2072
        %v2085 = vadd.f32 %v1876, %v2075
        %s2086 = scalar_lea.vmem [#allocation2], 16
        %v2087 = vld [vmem:[%s2086] sm:$0xf]
        %v2088 = vld [vmem:[%s2086 + $0x8] sm:$0xf]
        %v2089 = vld [vmem:[%s2086 + $0x10] sm:$0xf]
        %v2090 = vld [vmem:[%s2086 + $0x18] sm:$0xf]
        %v2091 = vld [vmem:[%s2086 + $0x20] sm:$0xf]
        %v2092 = vld [vmem:[%s2086 + $0x28] sm:$0xf]
        %v2093 = vld [vmem:[%s2086 + $0x30] sm:$0xf]
        %v2094 = vld [vmem:[%s2086 + $0x38] sm:$0xf]
        %v2095 = vld [vmem:[#allocation8 + $0x180] sm:$0xf]
        %v2096 = vld [vmem:[#allocation8 + $0x184] sm:$0xf]
        %v2097 = vld [vmem:[#allocation8 + $0x188] sm:$0xf]
        %v2098 = vld [vmem:[#allocation8 + $0x18c] sm:$0xf]
        %v2099 = vld [vmem:[#allocation8 + $0x190] sm:$0xf]
        %v2100 = vld [vmem:[#allocation8 + $0x194] sm:$0xf]
        %v2101 = vld [vmem:[#allocation8 + $0x198] sm:$0xf]
        %v2102 = vld [vmem:[#allocation8 + $0x19c] sm:$0xf]
        %v2103 = vld [vmem:[#allocation8 + $0x1a0] sm:$0xf]
        %v2104 = vld [vmem:[#allocation8 + $0x1a4] sm:$0xf]
        %v2105 = vld [vmem:[#allocation8 + $0x1a8] sm:$0xf]
        %v2106 = vld [vmem:[#allocation8 + $0x1ac] sm:$0xf]
        %v2107 = vld [vmem:[#allocation8 + $0x1b0] sm:$0xf]
        %v2108 = vld [vmem:[#allocation8 + $0x1b4] sm:$0xf]
        %v2109 = vld [vmem:[#allocation8 + $0x1b8] sm:$0xf]
        %v2110 = vld [vmem:[#allocation8 + $0x1bc] sm:$0xf]
        %v2119 = vunpack.c.l.b16 %v2087
        %v2120 = vunpack.c.l.b16 %v2088
        %v2121 = vunpack.c.l.b16 %v2089
        %v2122 = vunpack.c.l.b16 %v2090
        %v2123 = vunpack.c.l.b16 %v2091
        %v2124 = vunpack.c.l.b16 %v2092
        %v2125 = vunpack.c.l.b16 %v2093
        %v2126 = vunpack.c.l.b16 %v2094
        %v2127 = vpack.c.b16 %v2120, %v2119
        %v2128 = vpack.c.b16 %v2122, %v2121
        %v2129 = vpack.c.b16 %v2124, %v2123
        %v2130 = vpack.c.b16 %v2126, %v2125
        %v2151 = vunpack.c.l.b16 %v2095
        %v2152 = vunpack.c.l.b16 %v2096
        %v2153 = vunpack.c.l.b16 %v2097
        %v2154 = vunpack.c.l.b16 %v2098
        %v2155 = vunpack.c.l.b16 %v2099
        %v2156 = vunpack.c.l.b16 %v2100
        %v2157 = vunpack.c.l.b16 %v2101
        %v2158 = vunpack.c.l.b16 %v2102
        %v2159 = vunpack.c.l.b16 %v2103
        %v2160 = vunpack.c.l.b16 %v2104
        %v2161 = vunpack.c.l.b16 %v2105
        %v2162 = vunpack.c.l.b16 %v2106
        %v2163 = vunpack.c.l.b16 %v2107
        %v2164 = vunpack.c.l.b16 %v2108
        %v2165 = vunpack.c.l.b16 %v2109
        %v2166 = vunpack.c.l.b16 %v2110
        %v2167 = vpack.c.b16 %v2152, %v2151
        %v2168 = vpack.c.b16 %v2154, %v2153
        %v2169 = vpack.c.b16 %v2156, %v2155
        %v2170 = vpack.c.b16 %v2158, %v2157
        %v2171 = vpack.c.b16 %v2160, %v2159
        %v2172 = vpack.c.b16 %v2162, %v2161
        %v2173 = vpack.c.b16 %v2164, %v2163
        %v2174 = vpack.c.b16 %v2166, %v2165
        %2183 = vmatprep.subr.bf16.mxu0 0
        %2184 = vmatpush1.bf16.msra.mxu0 %v2174
        %2185 = vmatprep.subr.bf16.mxu0 0
        %2186 = vmatpush1.bf16.msra.mxu0 %v2173
        %2187 = vmatprep.subr.bf16.mxu0 0
        %2188 = vmatpush1.bf16.msra.mxu0 %v2172
        %2189 = vmatprep.subr.bf16.mxu0 0
        %2190 = vmatpush1.bf16.msra.mxu0 %v2171
        %2191 = vmatprep.subr.bf16.mxu0 0
        %2192 = vmatpush1.bf16.msra.mxu0 %v2170
        %2193 = vmatprep.subr.bf16.mxu0 0
        %2194 = vmatpush1.bf16.msra.mxu0 %v2169
        %2195 = vmatprep.subr.bf16.mxu0 0
        %2196 = vmatpush1.bf16.msra.mxu0 %v2168
        %2197 = vmatprep.subr.bf16.mxu0 0
        %2198 = vmatpush1.bf16.msra.mxu0 %v2167
        %2199 = vmatprep.subr.bf16.mxu0 0
        %2200 = vmatpush2.bf16.msra.mxu0 0
        %2201 = vmatprep.subr.bf16.mxu0 0
        %2202 = vmatpush2.bf16.msra.mxu0 0
        %2203 = vmatprep.subr.bf16.mxu0 0
        %2204 = vmatpush2.bf16.msra.mxu0 0
        %2205 = vmatprep.subr.bf16.mxu0 0
        %2206 = vmatpush2.bf16.msra.mxu0 0
        %2207 = vmatprep.subr.bf16.mxu0 0
        %2208 = vmatpush2.bf16.msra.mxu0 0
        %2209 = vmatprep.subr.bf16.mxu0 0
        %2210 = vmatpush2.bf16.msra.mxu0 0
        %2211 = vmatprep.subr.bf16.mxu0 0
        %2212 = vmatpush2.bf16.msra.mxu0 0
        %2213 = vmatprep.subr.bf16.mxu0 0
        %2214 = vmatpush2.bf16.msra.mxu0 0
        %2215 = vmatprep.mubr.bf16.mxu0 0
        %2216 = vmatmul.mubr.bf16.gmra.mxu0 %v2127
        %v2217 = vpop.f32.mrf.mxu0
        %v2218 = vadd.f32 0.0, %v2217
        %v2219 = vpop.f32.mrf.mxu0
        %v2220 = vpop.f32.mrf.mxu0
        %v2221 = vadd.f32 0.0, %v2220
        %v2222 = vpop.f32.mrf.mxu0
        %2223 = vmatprep.mubr.bf16.mxu0 0
        %2224 = vmatmul.mubr.bf16.gmra.mxu0 %v2128
        %v2225 = vpop.f32.mrf.mxu0
        %v2226 = vadd.f32 0.0, %v2225
        %v2227 = vpop.f32.mrf.mxu0
        %v2228 = vpop.f32.mrf.mxu0
        %v2229 = vadd.f32 0.0, %v2228
        %v2230 = vpop.f32.mrf.mxu0
        %2231 = vmatprep.mubr.bf16.mxu0 0
        %2232 = vmatmul.mubr.bf16.gmra.mxu0 %v2129
        %v2233 = vpop.f32.mrf.mxu0
        %v2234 = vadd.f32 0.0, %v2233
        %v2235 = vpop.f32.mrf.mxu0
        %v2236 = vpop.f32.mrf.mxu0
        %v2237 = vadd.f32 0.0, %v2236
        %v2238 = vpop.f32.mrf.mxu0
        %2239 = vmatprep.mubr.bf16.mxu0 0
        %2240 = vmatmul.mubr.bf16.gmra.mxu0 %v2130
        %v2241 = vpop.f32.mrf.mxu0
        %v2242 = vadd.f32 0.0, %v2241
        %v2243 = vpop.f32.mrf.mxu0
        %v2244 = vpop.f32.mrf.mxu0
        %v2245 = vadd.f32 0.0, %v2244
        %v2246 = vpop.f32.mrf.mxu0
        %2247 = vdwg.mxu0
        %v2248 = vadd.f32 %v2078, %v2218
        %v2249 = vadd.f32 %v2079, %v2221
        %v2250 = vadd.f32 %v2080, %v2226
        %v2251 = vadd.f32 %v2081, %v2229
        %v2252 = vadd.f32 %v2082, %v2234
        %v2253 = vadd.f32 %v2083, %v2237
        %v2254 = vadd.f32 %v2084, %v2242
        %v2255 = vadd.f32 %v2085, %v2245
        %v2256 = vld [vmem:[%s2086] sm:$0xf]
        %v2257 = vld [vmem:[%s2086 + $0x4] sm:$0x1]
        %v2258 = vld [vmem:[%s2086 + $0x8] sm:$0xf]
        %v2259 = vld [vmem:[%s2086 + $0xc] sm:$0x1]
        %v2260 = vld [vmem:[%s2086 + $0x10] sm:$0xf]
        %v2261 = vld [vmem:[%s2086 + $0x14] sm:$0x1]
        %v2262 = vld [vmem:[%s2086 + $0x18] sm:$0xf]
        %v2263 = vld [vmem:[%s2086 + $0x1c] sm:$0x1]
        %v2264 = vld [vmem:[%s2086 + $0x20] sm:$0xf]
        %v2265 = vld [vmem:[%s2086 + $0x24] sm:$0x1]
        %v2266 = vld [vmem:[%s2086 + $0x28] sm:$0xf]
        %v2267 = vld [vmem:[%s2086 + $0x2c] sm:$0x1]
        %v2268 = vld [vmem:[%s2086 + $0x30] sm:$0xf]
        %v2269 = vld [vmem:[%s2086 + $0x34] sm:$0x1]
        %v2270 = vld [vmem:[%s2086 + $0x38] sm:$0xf]
        %v2271 = vld [vmem:[%s2086 + $0x3c] sm:$0x1]
        %v2273 = vshrl.u32 %v2256, 16
        %v2275 = vrot.slane %v2273, 4
        %v2276 = vshll.u32 %v2256, 16
        %v2278 = vrot.slane %v2276, 5
        %v2279 = vor.u32 %v2275, %v2278
        %v2280 = vrot.slane %v2279, 4
        %v2282 = vshll.u32 %v2257, 16
        %v2284 = vrot.slane %v2282, 5
        %v2285 = vsel %vm820, %v2280, %v2284
        %v2287 = vshrl.u32 %v2258, 16
        %v2289 = vrot.slane %v2287, 4
        %v2290 = vshll.u32 %v2258, 16
        %v2292 = vrot.slane %v2290, 5
        %v2293 = vor.u32 %v2289, %v2292
        %v2294 = vrot.slane %v2293, 4
        %v2296 = vshll.u32 %v2259, 16
        %v2298 = vrot.slane %v2296, 5
        %v2299 = vsel %vm820, %v2294, %v2298
        %v2301 = vshrl.u32 %v2260, 16
        %v2303 = vrot.slane %v2301, 4
        %v2304 = vshll.u32 %v2260, 16
        %v2306 = vrot.slane %v2304, 5
        %v2307 = vor.u32 %v2303, %v2306
        %v2308 = vrot.slane %v2307, 4
        %v2310 = vshll.u32 %v2261, 16
        %v2312 = vrot.slane %v2310, 5
        %v2313 = vsel %vm820, %v2308, %v2312
        %v2315 = vshrl.u32 %v2262, 16
        %v2317 = vrot.slane %v2315, 4
        %v2318 = vshll.u32 %v2262, 16
        %v2320 = vrot.slane %v2318, 5
        %v2321 = vor.u32 %v2317, %v2320
        %v2322 = vrot.slane %v2321, 4
        %v2324 = vshll.u32 %v2263, 16
        %v2326 = vrot.slane %v2324, 5
        %v2327 = vsel %vm820, %v2322, %v2326
        %v2329 = vshrl.u32 %v2264, 16
        %v2331 = vrot.slane %v2329, 4
        %v2332 = vshll.u32 %v2264, 16
        %v2334 = vrot.slane %v2332, 5
        %v2335 = vor.u32 %v2331, %v2334
        %v2336 = vrot.slane %v2335, 4
        %v2338 = vshll.u32 %v2265, 16
        %v2340 = vrot.slane %v2338, 5
        %v2341 = vsel %vm820, %v2336, %v2340
        %v2343 = vshrl.u32 %v2266, 16
        %v2345 = vrot.slane %v2343, 4
        %v2346 = vshll.u32 %v2266, 16
        %v2348 = vrot.slane %v2346, 5
        %v2349 = vor.u32 %v2345, %v2348
        %v2350 = vrot.slane %v2349, 4
        %v2352 = vshll.u32 %v2267, 16
        %v2354 = vrot.slane %v2352, 5
        %v2355 = vsel %vm820, %v2350, %v2354
        %v2357 = vshrl.u32 %v2268, 16
        %v2359 = vrot.slane %v2357, 4
        %v2360 = vshll.u32 %v2268, 16
        %v2362 = vrot.slane %v2360, 5
        %v2363 = vor.u32 %v2359, %v2362
        %v2364 = vrot.slane %v2363, 4
        %v2366 = vshll.u32 %v2269, 16
        %v2368 = vrot.slane %v2366, 5
        %v2369 = vsel %vm820, %v2364, %v2368
        %v2371 = vshrl.u32 %v2270, 16
        %v2373 = vrot.slane %v2371, 4
        %v2374 = vshll.u32 %v2270, 16
        %v2376 = vrot.slane %v2374, 5
        %v2377 = vor.u32 %v2373, %v2376
        %v2378 = vrot.slane %v2377, 4
        %v2380 = vshll.u32 %v2271, 16
        %v2382 = vrot.slane %v2380, 5
        %v2383 = vsel %vm820, %v2378, %v2382
        %v2384 = vld [vmem:[#allocation8 + $0x1c0] sm:$0xf]
        %v2385 = vld [vmem:[#allocation8 + $0x1c4] sm:$0xf]
        %v2386 = vld [vmem:[#allocation8 + $0x1c8] sm:$0xf]
        %v2387 = vld [vmem:[#allocation8 + $0x1cc] sm:$0xf]
        %v2388 = vld [vmem:[#allocation8 + $0x1d0] sm:$0xf]
        %v2389 = vld [vmem:[#allocation8 + $0x1d4] sm:$0xf]
        %v2390 = vld [vmem:[#allocation8 + $0x1d8] sm:$0xf]
        %v2391 = vld [vmem:[#allocation8 + $0x1dc] sm:$0xf]
        %v2392 = vld [vmem:[#allocation8 + $0x1e0] sm:$0xf]
        %v2393 = vld [vmem:[#allocation8 + $0x1e4] sm:$0xf]
        %v2394 = vld [vmem:[#allocation8 + $0x1e8] sm:$0xf]
        %v2395 = vld [vmem:[#allocation8 + $0x1ec] sm:$0xf]
        %v2396 = vld [vmem:[#allocation8 + $0x1f0] sm:$0xf]
        %v2397 = vld [vmem:[#allocation8 + $0x1f4] sm:$0xf]
        %v2398 = vld [vmem:[#allocation8 + $0x1f8] sm:$0xf]
        %v2399 = vld [vmem:[#allocation8 + $0x1fc] sm:$0xf]
        %v2400 = vunpack.c.l.b16 %v2285
        %v2401 = vunpack.c.l.b16 %v2299
        %v2402 = vunpack.c.l.b16 %v2313
        %v2403 = vunpack.c.l.b16 %v2327
        %v2404 = vunpack.c.l.b16 %v2341
        %v2405 = vunpack.c.l.b16 %v2355
        %v2406 = vunpack.c.l.b16 %v2369
        %v2407 = vunpack.c.l.b16 %v2383
        %v2408 = vpack.c.b16 %v2401, %v2400
        %v2409 = vpack.c.b16 %v2403, %v2402
        %v2410 = vpack.c.b16 %v2405, %v2404
        %v2411 = vpack.c.b16 %v2407, %v2406
        %v2432 = vunpack.c.l.b16 %v2384
        %v2433 = vunpack.c.l.b16 %v2385
        %v2434 = vunpack.c.l.b16 %v2386
        %v2435 = vunpack.c.l.b16 %v2387
        %v2436 = vunpack.c.l.b16 %v2388
        %v2437 = vunpack.c.l.b16 %v2389
        %v2438 = vunpack.c.l.b16 %v2390
        %v2439 = vunpack.c.l.b16 %v2391
        %v2440 = vunpack.c.l.b16 %v2392
        %v2441 = vunpack.c.l.b16 %v2393
        %v2442 = vunpack.c.l.b16 %v2394
        %v2443 = vunpack.c.l.b16 %v2395
        %v2444 = vunpack.c.l.b16 %v2396
        %v2445 = vunpack.c.l.b16 %v2397
        %v2446 = vunpack.c.l.b16 %v2398
        %v2447 = vunpack.c.l.b16 %v2399
        %v2448 = vpack.c.b16 %v2433, %v2432
        %v2449 = vpack.c.b16 %v2435, %v2434
        %v2450 = vpack.c.b16 %v2437, %v2436
        %v2451 = vpack.c.b16 %v2439, %v2438
        %v2452 = vpack.c.b16 %v2441, %v2440
        %v2453 = vpack.c.b16 %v2443, %v2442
        %v2454 = vpack.c.b16 %v2445, %v2444
        %v2455 = vpack.c.b16 %v2447, %v2446
        %2464 = vmatprep.subr.bf16.mxu0 0
        %2465 = vmatpush1.bf16.msra.mxu0 %v2455
        %2466 = vmatprep.subr.bf16.mxu0 0
        %2467 = vmatpush1.bf16.msra.mxu0 %v2454
        %2468 = vmatprep.subr.bf16.mxu0 0
        %2469 = vmatpush1.bf16.msra.mxu0 %v2453
        %2470 = vmatprep.subr.bf16.mxu0 0
        %2471 = vmatpush1.bf16.msra.mxu0 %v2452
        %2472 = vmatprep.subr.bf16.mxu0 0
        %2473 = vmatpush1.bf16.msra.mxu0 %v2451
        %2474 = vmatprep.subr.bf16.mxu0 0
        %2475 = vmatpush1.bf16.msra.mxu0 %v2450
        %2476 = vmatprep.subr.bf16.mxu0 0
        %2477 = vmatpush1.bf16.msra.mxu0 %v2449
        %2478 = vmatprep.subr.bf16.mxu0 0
        %2479 = vmatpush1.bf16.msra.mxu0 %v2448
        %2480 = vmatprep.subr.bf16.mxu0 0
        %2481 = vmatpush2.bf16.msra.mxu0 0
        %2482 = vmatprep.subr.bf16.mxu0 0
        %2483 = vmatpush2.bf16.msra.mxu0 0
        %2484 = vmatprep.subr.bf16.mxu0 0
        %2485 = vmatpush2.bf16.msra.mxu0 0
        %2486 = vmatprep.subr.bf16.mxu0 0
        %2487 = vmatpush2.bf16.msra.mxu0 0
        %2488 = vmatprep.subr.bf16.mxu0 0
        %2489 = vmatpush2.bf16.msra.mxu0 0
        %2490 = vmatprep.subr.bf16.mxu0 0
        %2491 = vmatpush2.bf16.msra.mxu0 0
        %2492 = vmatprep.subr.bf16.mxu0 0
        %2493 = vmatpush2.bf16.msra.mxu0 0
        %2494 = vmatprep.subr.bf16.mxu0 0
        %2495 = vmatpush2.bf16.msra.mxu0 0
        %2496 = vmatprep.mubr.bf16.mxu0 0
        %2497 = vmatmul.mubr.bf16.gmra.mxu0 %v2408
        %v2498 = vpop.f32.mrf.mxu0
        %v2499 = vadd.f32 0.0, %v2498
        %v2500 = vpop.f32.mrf.mxu0
        %v2501 = vpop.f32.mrf.mxu0
        %v2502 = vadd.f32 0.0, %v2501
        %v2503 = vpop.f32.mrf.mxu0
        %2504 = vmatprep.mubr.bf16.mxu0 0
        %2505 = vmatmul.mubr.bf16.gmra.mxu0 %v2409
        %v2506 = vpop.f32.mrf.mxu0
        %v2507 = vadd.f32 0.0, %v2506
        %v2508 = vpop.f32.mrf.mxu0
        %v2509 = vpop.f32.mrf.mxu0
        %v2510 = vadd.f32 0.0, %v2509
        %v2511 = vpop.f32.mrf.mxu0
        %2512 = vmatprep.mubr.bf16.mxu0 0
        %2513 = vmatmul.mubr.bf16.gmra.mxu0 %v2410
        %v2514 = vpop.f32.mrf.mxu0
        %v2515 = vadd.f32 0.0, %v2514
        %v2516 = vpop.f32.mrf.mxu0
        %v2517 = vpop.f32.mrf.mxu0
        %v2518 = vadd.f32 0.0, %v2517
        %v2519 = vpop.f32.mrf.mxu0
        %2520 = vmatprep.mubr.bf16.mxu0 0
        %2521 = vmatmul.mubr.bf16.gmra.mxu0 %v2411
        %v2522 = vpop.f32.mrf.mxu0
        %v2523 = vadd.f32 0.0, %v2522
        %v2524 = vpop.f32.mrf.mxu0
        %v2525 = vpop.f32.mrf.mxu0
        %v2526 = vadd.f32 0.0, %v2525
        %v2527 = vpop.f32.mrf.mxu0
        %2528 = vdwg.mxu0
        %v2529 = vadd.f32 %v2248, %v2499
        %v2530 = vadd.f32 %v2249, %v2502
        %v2531 = vadd.f32 %v2250, %v2507
        %v2532 = vadd.f32 %v2251, %v2510
        %v2533 = vadd.f32 %v2252, %v2515
        %v2534 = vadd.f32 %v2253, %v2518
        %v2535 = vadd.f32 %v2254, %v2523
        %v2536 = vadd.f32 %v2255, %v2526
        %v2537 = vld [vmem:[%s2086] sm:$0xe]
        %v2538 = vld [vmem:[%s2086 + $0x8] sm:$0xe]
        %v2539 = vld [vmem:[%s2086 + $0x10] sm:$0xe]
        %v2540 = vld [vmem:[%s2086 + $0x18] sm:$0xe]
        %v2541 = vld [vmem:[%s2086 + $0x20] sm:$0xe]
        %v2542 = vld [vmem:[%s2086 + $0x28] sm:$0xe]
        %v2543 = vld [vmem:[%s2086 + $0x30] sm:$0xe]
        %v2544 = vld [vmem:[%s2086 + $0x38] sm:$0xe]
        %v2561 = vrot.slane %v2537, 5
        %v2562 = vrot.slane %v2561, 4
        %v2563 = vrot.slane %v2257, 5
        %v2564 = vsel %vm1241, %v2562, %v2563
        %v2565 = vrot.slane %v2538, 5
        %v2566 = vrot.slane %v2565, 4
        %v2567 = vrot.slane %v2259, 5
        %v2568 = vsel %vm1241, %v2566, %v2567
        %v2569 = vrot.slane %v2539, 5
        %v2570 = vrot.slane %v2569, 4
        %v2571 = vrot.slane %v2261, 5
        %v2572 = vsel %vm1241, %v2570, %v2571
        %v2573 = vrot.slane %v2540, 5
        %v2574 = vrot.slane %v2573, 4
        %v2575 = vrot.slane %v2263, 5
        %v2576 = vsel %vm1241, %v2574, %v2575
        %v2577 = vrot.slane %v2541, 5
        %v2578 = vrot.slane %v2577, 4
        %v2579 = vrot.slane %v2265, 5
        %v2580 = vsel %vm1241, %v2578, %v2579
        %v2581 = vrot.slane %v2542, 5
        %v2582 = vrot.slane %v2581, 4
        %v2583 = vrot.slane %v2267, 5
        %v2584 = vsel %vm1241, %v2582, %v2583
        %v2585 = vrot.slane %v2543, 5
        %v2586 = vrot.slane %v2585, 4
        %v2587 = vrot.slane %v2269, 5
        %v2588 = vsel %vm1241, %v2586, %v2587
        %v2589 = vrot.slane %v2544, 5
        %v2590 = vrot.slane %v2589, 4
        %v2591 = vrot.slane %v2271, 5
        %v2592 = vsel %vm1241, %v2590, %v2591
        %v2593 = vld [vmem:[#allocation8 + $0x200] sm:$0xf]
        %v2594 = vld [vmem:[#allocation8 + $0x204] sm:$0xf]
        %v2595 = vld [vmem:[#allocation8 + $0x208] sm:$0xf]
        %v2596 = vld [vmem:[#allocation8 + $0x20c] sm:$0xf]
        %v2597 = vld [vmem:[#allocation8 + $0x210] sm:$0xf]
        %v2598 = vld [vmem:[#allocation8 + $0x214] sm:$0xf]
        %v2599 = vld [vmem:[#allocation8 + $0x218] sm:$0xf]
        %v2600 = vld [vmem:[#allocation8 + $0x21c] sm:$0xf]
        %v2601 = vld [vmem:[#allocation8 + $0x220] sm:$0xf]
        %v2602 = vld [vmem:[#allocation8 + $0x224] sm:$0xf]
        %v2603 = vld [vmem:[#allocation8 + $0x228] sm:$0xf]
        %v2604 = vld [vmem:[#allocation8 + $0x22c] sm:$0xf]
        %v2605 = vld [vmem:[#allocation8 + $0x230] sm:$0xf]
        %v2606 = vld [vmem:[#allocation8 + $0x234] sm:$0xf]
        %v2607 = vld [vmem:[#allocation8 + $0x238] sm:$0xf]
        %v2608 = vld [vmem:[#allocation8 + $0x23c] sm:$0xf]
        %v2609 = vunpack.c.l.b16 %v2564
        %v2610 = vunpack.c.l.b16 %v2568
        %v2611 = vunpack.c.l.b16 %v2572
        %v2612 = vunpack.c.l.b16 %v2576
        %v2613 = vunpack.c.l.b16 %v2580
        %v2614 = vunpack.c.l.b16 %v2584
        %v2615 = vunpack.c.l.b16 %v2588
        %v2616 = vunpack.c.l.b16 %v2592
        %v2617 = vpack.c.b16 %v2610, %v2609
        %v2618 = vpack.c.b16 %v2612, %v2611
        %v2619 = vpack.c.b16 %v2614, %v2613
        %v2620 = vpack.c.b16 %v2616, %v2615
        %v2641 = vunpack.c.l.b16 %v2593
        %v2642 = vunpack.c.l.b16 %v2594
        %v2643 = vunpack.c.l.b16 %v2595
        %v2644 = vunpack.c.l.b16 %v2596
        %v2645 = vunpack.c.l.b16 %v2597
        %v2646 = vunpack.c.l.b16 %v2598
        %v2647 = vunpack.c.l.b16 %v2599
        %v2648 = vunpack.c.l.b16 %v2600
        %v2649 = vunpack.c.l.b16 %v2601
        %v2650 = vunpack.c.l.b16 %v2602
        %v2651 = vunpack.c.l.b16 %v2603
        %v2652 = vunpack.c.l.b16 %v2604
        %v2653 = vunpack.c.l.b16 %v2605
        %v2654 = vunpack.c.l.b16 %v2606
        %v2655 = vunpack.c.l.b16 %v2607
        %v2656 = vunpack.c.l.b16 %v2608
        %v2657 = vpack.c.b16 %v2642, %v2641
        %v2658 = vpack.c.b16 %v2644, %v2643
        %v2659 = vpack.c.b16 %v2646, %v2645
        %v2660 = vpack.c.b16 %v2648, %v2647
        %v2661 = vpack.c.b16 %v2650, %v2649
        %v2662 = vpack.c.b16 %v2652, %v2651
        %v2663 = vpack.c.b16 %v2654, %v2653
        %v2664 = vpack.c.b16 %v2656, %v2655
        %2673 = vmatprep.subr.bf16.mxu0 0
        %2674 = vmatpush1.bf16.msra.mxu0 %v2664
        %2675 = vmatprep.subr.bf16.mxu0 0
        %2676 = vmatpush1.bf16.msra.mxu0 %v2663
        %2677 = vmatprep.subr.bf16.mxu0 0
        %2678 = vmatpush1.bf16.msra.mxu0 %v2662
        %2679 = vmatprep.subr.bf16.mxu0 0
        %2680 = vmatpush1.bf16.msra.mxu0 %v2661
        %2681 = vmatprep.subr.bf16.mxu0 0
        %2682 = vmatpush1.bf16.msra.mxu0 %v2660
        %2683 = vmatprep.subr.bf16.mxu0 0
        %2684 = vmatpush1.bf16.msra.mxu0 %v2659
        %2685 = vmatprep.subr.bf16.mxu0 0
        %2686 = vmatpush1.bf16.msra.mxu0 %v2658
        %2687 = vmatprep.subr.bf16.mxu0 0
        %2688 = vmatpush1.bf16.msra.mxu0 %v2657
        %2689 = vmatprep.subr.bf16.mxu0 0
        %2690 = vmatpush2.bf16.msra.mxu0 0
        %2691 = vmatprep.subr.bf16.mxu0 0
        %2692 = vmatpush2.bf16.msra.mxu0 0
        %2693 = vmatprep.subr.bf16.mxu0 0
        %2694 = vmatpush2.bf16.msra.mxu0 0
        %2695 = vmatprep.subr.bf16.mxu0 0
        %2696 = vmatpush2.bf16.msra.mxu0 0
        %2697 = vmatprep.subr.bf16.mxu0 0
        %2698 = vmatpush2.bf16.msra.mxu0 0
        %2699 = vmatprep.subr.bf16.mxu0 0
        %2700 = vmatpush2.bf16.msra.mxu0 0
        %2701 = vmatprep.subr.bf16.mxu0 0
        %2702 = vmatpush2.bf16.msra.mxu0 0
        %2703 = vmatprep.subr.bf16.mxu0 0
        %2704 = vmatpush2.bf16.msra.mxu0 0
        %2705 = vmatprep.mubr.bf16.mxu0 0
        %2706 = vmatmul.mubr.bf16.gmra.mxu0 %v2617
        %v2707 = vpop.f32.mrf.mxu0
        %v2708 = vadd.f32 0.0, %v2707
        %v2709 = vpop.f32.mrf.mxu0
        %v2710 = vpop.f32.mrf.mxu0
        %v2711 = vadd.f32 0.0, %v2710
        %v2712 = vpop.f32.mrf.mxu0
        %2713 = vmatprep.mubr.bf16.mxu0 0
        %2714 = vmatmul.mubr.bf16.gmra.mxu0 %v2618
        %v2715 = vpop.f32.mrf.mxu0
        %v2716 = vadd.f32 0.0, %v2715
        %v2717 = vpop.f32.mrf.mxu0
        %v2718 = vpop.f32.mrf.mxu0
        %v2719 = vadd.f32 0.0, %v2718
        %v2720 = vpop.f32.mrf.mxu0
        %2721 = vmatprep.mubr.bf16.mxu0 0
        %2722 = vmatmul.mubr.bf16.gmra.mxu0 %v2619
        %v2723 = vpop.f32.mrf.mxu0
        %v2724 = vadd.f32 0.0, %v2723
        %v2725 = vpop.f32.mrf.mxu0
        %v2726 = vpop.f32.mrf.mxu0
        %v2727 = vadd.f32 0.0, %v2726
        %v2728 = vpop.f32.mrf.mxu0
        %2729 = vmatprep.mubr.bf16.mxu0 0
        %2730 = vmatmul.mubr.bf16.gmra.mxu0 %v2620
        %v2731 = vpop.f32.mrf.mxu0
        %v2732 = vadd.f32 0.0, %v2731
        %v2733 = vpop.f32.mrf.mxu0
        %v2734 = vpop.f32.mrf.mxu0
        %v2735 = vadd.f32 0.0, %v2734
        %v2736 = vpop.f32.mrf.mxu0
        %2737 = vdwg.mxu0
        %v2738 = vadd.f32 %v2529, %v2708
        %v2739 = vadd.f32 %v2530, %v2711
        %v2740 = vadd.f32 %v2531, %v2716
        %v2741 = vadd.f32 %v2532, %v2719
        %v2742 = vadd.f32 %v2533, %v2724
        %v2743 = vadd.f32 %v2534, %v2727
        %v2744 = vadd.f32 %v2535, %v2732
        %v2745 = vadd.f32 %v2536, %v2735
        %v2746 = vld [vmem:[%s4] sm:$0x1]
        %v2748 = vlaneseq
        %v2749 = vshrl.u32 %v2748, 7
        %v2750 = vsub.s32 0, %v2749
        %v2751 = vrot.slane %v2746, %v2750
        %v2753 = vadd.f32 %v2738, %v2751
        %v2754 = vadd.f32 %v2739, %v2751
        %v2755 = vadd.f32 %v2740, %v2751
        %v2756 = vadd.f32 %v2741, %v2751
        %v2757 = vadd.f32 %v2742, %v2751
        %v2758 = vadd.f32 %v2743, %v2751
        %v2759 = vadd.f32 %v2744, %v2751
        %v2760 = vadd.f32 %v2745, %v2751
        %v2761 = vmax.f32 %v2753, 0.0
        %v2762 = vmax.f32 %v2754, 0.0
        %v2763 = vmax.f32 %v2755, 0.0
        %v2764 = vmax.f32 %v2756, 0.0
        %v2765 = vmax.f32 %v2757, 0.0
        %v2766 = vmax.f32 %v2758, 0.0
        %v2767 = vmax.f32 %v2759, 0.0
        %v2768 = vmax.f32 %v2760, 0.0
        %v2769 = vpack.c.bf16 %v2762, %v2761
        %v2770 = vpack.c.bf16 %v2764, %v2763
        %v2771 = vpack.c.bf16 %v2766, %v2765
        %v2772 = vpack.c.bf16 %v2768, %v2767
        %v2773 = vld [vmem:[#allocation9] sm:$0xf]
        %v2774 = vld [vmem:[#allocation9 + $0x4] sm:$0xf]
        %v2775 = vld [vmem:[#allocation9 + $0x8] sm:$0xf]
        %v2776 = vld [vmem:[#allocation9 + $0xc] sm:$0xf]
        %v2777 = vld [vmem:[#allocation9 + $0x10] sm:$0xf]
        %v2778 = vld [vmem:[#allocation9 + $0x14] sm:$0xf]
        %v2779 = vld [vmem:[#allocation9 + $0x18] sm:$0xf]
        %v2780 = vld [vmem:[#allocation9 + $0x1c] sm:$0xf]
        %v2781 = vld [vmem:[#allocation9 + $0x20] sm:$0xf]
        %v2782 = vld [vmem:[#allocation9 + $0x24] sm:$0xf]
        %v2783 = vld [vmem:[#allocation9 + $0x28] sm:$0xf]
        %v2784 = vld [vmem:[#allocation9 + $0x2c] sm:$0xf]
        %v2785 = vld [vmem:[#allocation9 + $0x30] sm:$0xf]
        %v2786 = vld [vmem:[#allocation9 + $0x34] sm:$0xf]
        %v2787 = vld [vmem:[#allocation9 + $0x38] sm:$0xf]
        %v2788 = vld [vmem:[#allocation9 + $0x3c] sm:$0xf]
        %v2789 = vld [vmem:[%s6] sm:$0x1]
        %v2791 = vlaneseq
        %v2792 = vshrl.u32 %v2791, 7
        %v2793 = vsub.s32 0, %v2792
        %v2794 = vrot.slane %v2789, %v2793
        %v2812 = vunpack.c.l.b16 %v2773
        %v2813 = vunpack.c.l.b16 %v2774
        %v2814 = vunpack.c.l.b16 %v2775
        %v2815 = vunpack.c.l.b16 %v2776
        %v2816 = vunpack.c.l.b16 %v2777
        %v2817 = vunpack.c.l.b16 %v2778
        %v2818 = vunpack.c.l.b16 %v2779
        %v2819 = vunpack.c.l.b16 %v2780
        %v2820 = vunpack.c.l.b16 %v2781
        %v2821 = vunpack.c.l.b16 %v2782
        %v2822 = vunpack.c.l.b16 %v2783
        %v2823 = vunpack.c.l.b16 %v2784
        %v2824 = vunpack.c.l.b16 %v2785
        %v2825 = vunpack.c.l.b16 %v2786
        %v2826 = vunpack.c.l.b16 %v2787
        %v2827 = vunpack.c.l.b16 %v2788
        %v2828 = vpack.c.b16 %v2813, %v2812
        %v2829 = vpack.c.b16 %v2815, %v2814
        %v2830 = vpack.c.b16 %v2817, %v2816
        %v2831 = vpack.c.b16 %v2819, %v2818
        %v2832 = vpack.c.b16 %v2821, %v2820
        %v2833 = vpack.c.b16 %v2823, %v2822
        %v2834 = vpack.c.b16 %v2825, %v2824
        %v2835 = vpack.c.b16 %v2827, %v2826
        %2844 = vmatprep.subr.bf16.mxu0 0
        %2845 = vmatpush1.bf16.msra.mxu0 %v2835
        %2846 = vmatprep.subr.bf16.mxu0 0
        %2847 = vmatpush1.bf16.msra.mxu0 %v2834
        %2848 = vmatprep.subr.bf16.mxu0 0
        %2849 = vmatpush1.bf16.msra.mxu0 %v2833
        %2850 = vmatprep.subr.bf16.mxu0 0
        %2851 = vmatpush1.bf16.msra.mxu0 %v2832
        %2852 = vmatprep.subr.bf16.mxu0 0
        %2853 = vmatpush1.bf16.msra.mxu0 %v2831
        %2854 = vmatprep.subr.bf16.mxu0 0
        %2855 = vmatpush1.bf16.msra.mxu0 %v2830
        %2856 = vmatprep.subr.bf16.mxu0 0
        %2857 = vmatpush1.bf16.msra.mxu0 %v2829
        %2858 = vmatprep.subr.bf16.mxu0 0
        %2859 = vmatpush1.bf16.msra.mxu0 %v2828
        %2860 = vmatprep.subr.bf16.mxu0 0
        %2861 = vmatpush2.bf16.msra.mxu0 0
        %2862 = vmatprep.subr.bf16.mxu0 0
        %2863 = vmatpush2.bf16.msra.mxu0 0
        %2864 = vmatprep.subr.bf16.mxu0 0
        %2865 = vmatpush2.bf16.msra.mxu0 0
        %2866 = vmatprep.subr.bf16.mxu0 0
        %2867 = vmatpush2.bf16.msra.mxu0 0
        %2868 = vmatprep.subr.bf16.mxu0 0
        %2869 = vmatpush2.bf16.msra.mxu0 0
        %2870 = vmatprep.subr.bf16.mxu0 0
        %2871 = vmatpush2.bf16.msra.mxu0 0
        %2872 = vmatprep.subr.bf16.mxu0 0
        %2873 = vmatpush2.bf16.msra.mxu0 0
        %2874 = vmatprep.subr.bf16.mxu0 0
        %2875 = vmatpush2.bf16.msra.mxu0 0
        %2876 = vmatprep.mubr.bf16.mxu0 0
        %2877 = vmatmul.mubr.bf16.gmra.mxu0 %v2769
        %v2878 = vpop.f32.mrf.mxu0
        %v2879 = vadd.f32 %v2794, %v2878
        %v2880 = vpop.f32.mrf.mxu0
        %v2881 = vpop.f32.mrf.mxu0
        %v2882 = vadd.f32 %v2794, %v2881
        %v2883 = vpop.f32.mrf.mxu0
        %2884 = vmatprep.mubr.bf16.mxu0 0
        %2885 = vmatmul.mubr.bf16.gmra.mxu0 %v2770
        %v2886 = vpop.f32.mrf.mxu0
        %v2887 = vadd.f32 %v2794, %v2886
        %v2888 = vpop.f32.mrf.mxu0
        %v2889 = vpop.f32.mrf.mxu0
        %v2890 = vadd.f32 %v2794, %v2889
        %v2891 = vpop.f32.mrf.mxu0
        %2892 = vmatprep.mubr.bf16.mxu0 0
        %2893 = vmatmul.mubr.bf16.gmra.mxu0 %v2771
        %v2894 = vpop.f32.mrf.mxu0
        %v2895 = vadd.f32 %v2794, %v2894
        %v2896 = vpop.f32.mrf.mxu0
        %v2897 = vpop.f32.mrf.mxu0
        %v2898 = vadd.f32 %v2794, %v2897
        %v2899 = vpop.f32.mrf.mxu0
        %2900 = vmatprep.mubr.bf16.mxu0 0
        %2901 = vmatmul.mubr.bf16.gmra.mxu0 %v2772
        %v2902 = vpop.f32.mrf.mxu0
        %v2903 = vadd.f32 %v2794, %v2902
        %v2904 = vpop.f32.mrf.mxu0
        %v2905 = vpop.f32.mrf.mxu0
        %v2906 = vadd.f32 %v2794, %v2905
        %v2907 = vpop.f32.mrf.mxu0
        %2908 = vdwg.mxu0
        %v2909 = vadd.f32 %v580, %v2879
        %v2910 = vadd.f32 %v584, %v2882
        %v2911 = vadd.f32 %v590, %v2887
        %v2912 = vadd.f32 %v594, %v2890
        %v2913 = vadd.f32 %v600, %v2895
        %v2914 = vadd.f32 %v604, %v2898
        %v2915 = vadd.f32 %v610, %v2903
        %v2916 = vadd.f32 %v614, %v2906
        %v2917 = vmax.f32 %v2909, 0.0
        %v2918 = vmax.f32 %v2910, 0.0
        %v2919 = vmax.f32 %v2911, 0.0
        %v2920 = vmax.f32 %v2912, 0.0
        %v2921 = vmax.f32 %v2913, 0.0
        %v2922 = vmax.f32 %v2914, 0.0
        %v2923 = vmax.f32 %v2915, 0.0
        %v2924 = vmax.f32 %v2916, 0.0
        %v2925 = vpack.c.bf16 %v2918, %v2917
        %v2926 = vpack.c.bf16 %v2920, %v2919
        %v2927 = vpack.c.bf16 %v2922, %v2921
        %v2928 = vpack.c.bf16 %v2924, %v2923
        %v2933 = vunpack.c.l.b16 %v2925
        %v2934 = vunpack.c.h.b16 %v2925
        %v2935 = vunpack.c.l.b16 %v2926
        %v2936 = vunpack.c.h.b16 %v2926
        %v2937 = vunpack.c.l.b16 %v2927
        %v2938 = vunpack.c.h.b16 %v2927
        %v2939 = vunpack.c.l.b16 %v2928
        %v2940 = vunpack.c.h.b16 %v2928
        %v2941 = vpack.c.b16 %v2933, %v2933
        %v2942 = vpack.c.b16 %v2934, %v2934
        %v2943 = vpack.c.b16 %v2935, %v2935
        %v2944 = vpack.c.b16 %v2936, %v2936
        %v2945 = vpack.c.b16 %v2937, %v2937
        %v2946 = vpack.c.b16 %v2938, %v2938
        %v2947 = vpack.c.b16 %v2939, %v2939
        %v2948 = vpack.c.b16 %v2940, %v2940
        %2957 = vst [vmem:[%s340] sm:$0xf] %v2941
        %2958 = vst [vmem:[%s340 + $0x4] sm:$0xf] %v2942
        %2959 = vst [vmem:[%s340 + $0x8] sm:$0xf] %v2943
        %2960 = vst [vmem:[%s340 + $0xc] sm:$0xf] %v2944
        %2961 = vst [vmem:[%s340 + $0x10] sm:$0xf] %v2945
        %2962 = vst [vmem:[%s340 + $0x14] sm:$0xf] %v2946
        %2963 = vst [vmem:[%s340 + $0x18] sm:$0xf] %v2947
        %2964 = vst [vmem:[%s340 + $0x1c] sm:$0xf] %v2948
        %s2965 = sand.u32 %s186, 1
        %s2966 = scalar_lea.sflag [#allocation5], %s2965
        %s2967 = sand.u32 %s186, 1
        %s2968 = smul.addr %s2967, 32
        %s2969 = scalar_lea.vmem [#allocation11], %s2968
        // Predicated region
        $region65: #{tpu_custom_call.1} parent=47 // pred_check
          %p2970 = pneg %p196
        $region66: #{tpu_custom_call.1} parent=47 // pred_check_branch
          %2972 = sbr.rel (%p2970) target = $region68
        $region67: #{tpu_custom_call.1} parent=47 // pred_region
          %s2973 = smul.u32 8, %s26
          %s2975 = ssub.s32 512, 512
          %2976 = vsyncadd %s2966, %s2975
          %s2977 = smul.addr %s2973, 64
          %s2978 = scalar_lea.hbm %s7, %s2977
          %s2979 = sshll.u32 %s2969, 4
          %s2980 = int_to_ptr.vmem [resolvable:$true] %s2979
          %2985 = dma.vmem_to_hbm [thread:$0]  %s2980, 512, %s2978, %s2966, 64, 64, 4
        $region68: #{tpu_custom_call.1} parent=47 // pred_fallthru
          _
      $region48: #{tpu_custom_call.1} parent=5 // pred_fallthru
        _
      %p2986 = scmp.le.s32.totalorder 2, %s21
      // Predicated region
      $region69: #{tpu_custom_call.1} parent=5 // pred_check
        %p2987 = pneg %p2986
      $region70: #{tpu_custom_call.1} parent=5 // pred_check_branch
        %2989 = sbr.rel (%p2987) target = $region72
      $region71: #{tpu_custom_call.1} parent=5 // pred_region
        %s2990 = ssub.s32 %s21, 2
        // Predicated region
        $region73: #{tpu_custom_call.1} parent=71 // pred_check
          %p2991 = pneg %p202
        $region74: #{tpu_custom_call.1} parent=71 // pred_check_branch
          %2993 = sbr.rel (%p2991) target = $region76
        $region75: #{tpu_custom_call.1} parent=71 // pred_region
          %s2994 = sand.u32 %s187, 1
          %s2995 = scalar_lea.sflag [#allocation5], %s2994
          %s2996 = sand.u32 %s187, 1
          %s2997 = smul.addr %s2996, 32
          %s2998 = scalar_lea.vmem [#allocation11], %s2997
          %2999 = dma.done %s2995, 512
        $region76: #{tpu_custom_call.1} parent=71 // pred_fallthru
          _
      $region72: #{tpu_custom_call.1} parent=5 // pred_fallthru
        _
    $region6: #{tpu_custom_call.1} parent=1 // loop_footer
      %s25 = sadd.s32 1, %s21
    $region7: #{tpu_custom_call.1} parent=1 // loop_footer_branch
      %20 = sbr.rel target = $region3
    $region8: #{tpu_custom_call.1} parent=1 // loop_exit
      _
    %3000 = vsyncpa [#allocation4], 1
    %s3001 = scalar_lea.sflag [#allocation4], 1
    %3002 = vsyncpa %s3001, 1
    %3003 = vsyncpa [#allocation7], 1
    %3004 = vsyncpa [#allocation10], 1
    %3005 = vsyncpa [#allocation5], 1
    %s3006 = scalar_lea.sflag [#allocation5], 1
    %3007 = vsyncpa %s3006, 1

</llo_original>
